<compile_context>
chip_gen: v7x
topology: tpu7x:2x2x1
jax: 0.10.0
libtpu: 0.0.40
codegen_flags: <defaults>
</compile_context>

<pallas_src>
import math

import jax
import jax.numpy as jnp
from jax import lax
from jax.experimental import pallas as pl
from jax.experimental.pallas import tpu as pltpu


def _round_up(v, m):
    return ((v + m - 1) // m) * m


def _make_kernel(n_true, n_pad, d_true, tm, tj):
    n_chunks = n_pad // tj
    unroll_chunks = n_chunks <= 8

    def kernel(x_ref, xT_ref, w_ref, b_ref, out_ref, max_sc, sum_sc):
        # x_ref : (tm, d8)      row tile of features (VMEM)
        # xT_ref: (d8, n_pad)   transposed features, fully resident (VMEM)
        # w_ref : (d,)          Linear weight in SMEM (scalar reads)
        # b_ref : (1,)          Linear bias in SMEM
        bias = b_ref[0]

        max_sc[...] = jnp.full((tm, 1), -jnp.inf, jnp.float32)
        sum_sc[...] = jnp.zeros((tm, 1), jnp.float32)

        def col_mask(vals, j0):
            # Mask padded columns to -inf so exp() zeroes them.
            if n_true == n_pad:
                return vals
            if isinstance(j0, int) and j0 + tj <= n_true:
                return vals
            col = j0 + lax.broadcasted_iota(jnp.int32, (tm, tj), 1)
            return jnp.where(col < n_true, vals, -jnp.inf)

        # ---- pass 1: scores = relu(sum_k w[k]*|xi[k]-xj[k]| + b); track running row max ----
        def score_chunk(j0):
            acc = jnp.zeros((tm, tj), jnp.float32)
            for k in range(d_true):                        # static unroll over TRUE features
                xi_k = x_ref[:, k:k + 1]                   # (tm, 1)  lane-broadcast side
                xj_k = xT_ref[k:k + 1, pl.ds(j0, tj)]      # (1, tj)  lane-dense, sublane-broadcast
                acc = acc + w_ref[k] * jnp.abs(xi_k - xj_k)
            sc = col_mask(jnp.maximum(acc + bias, 0.0), j0)
            out_ref[:, pl.ds(j0, tj)] = sc
            max_sc[...] = jnp.maximum(max_sc[...], jnp.max(sc, axis=-1, keepdims=True))

        # ---- pass 2: e = exp(s - row_max); accumulate row sums ----
        def exp_chunk(j0):
            e = jnp.exp(out_ref[:, pl.ds(j0, tj)] - max_sc[...])
            out_ref[:, pl.ds(j0, tj)] = e
            sum_sc[...] = sum_sc[...] + jnp.sum(e, axis=-1, keepdims=True)

        # ---- pass 3: scale by 1/row_sum (multiply, not a wide divide) ----
        def norm_chunk(j0, inv):
            out_ref[:, pl.ds(j0, tj)] = out_ref[:, pl.ds(j0, tj)] * inv

        def run(fn):
            if unroll_chunks:
                for jc in range(n_chunks):
                    fn(jc * tj)
            else:
                @pl.loop(0, n_chunks)
                def _(jc):
                    fn(pl.multiple_of(jc * tj, tj))

        run(score_chunk)
        run(exp_chunk)
        inv = 1.0 / sum_sc[...]          # (tm, 1) exact reciprocal (keeps 1e-5 tolerance)
        run(lambda j0: norm_chunk(j0, inv))

    return kernel


def graph_learn_adaptive(x, w_vec, bias, *, tm=None, tj=128):
    """GraphLearn forward, mode='adaptive-learning'.

    x:     (N, D) node/sample features
    w_vec: (D,)   weight of nn.Linear(D, 1)
    bias:  scalar bias of nn.Linear(D, 1)
    returns (N, N) row-stochastic adjacency (softmax over dim=1).
    """
    n, d = x.shape
    n_pad = _round_up(n, tj)
    if tm is None:
        # Larger row tiles amortize per-step overhead; keep >=2 grid tiles so both
        # TensorCores on v7x stay busy.
        tm = 128 if n_pad >= 256 else 64
    n_pad = _round_up(n_pad, tm)
    d8 = _round_up(d, 8)                                  # sublane alignment only, no 128 pad

    x32 = x.astype(jnp.float32)
    x_p = jnp.zeros((n_pad, d8), jnp.float32).at[:n, :d].set(x32)
    xT_p = jnp.zeros((d8, n_pad), jnp.float32).at[:d, :n].set(x32.T)
    w_sm = jnp.asarray(w_vec, jnp.float32).reshape(-1)    # (d,) -> SMEM
    b_sm = jnp.full((1,), bias, dtype=jnp.float32)        # (1,) -> SMEM

    kernel = _make_kernel(n, n_pad, d, tm, tj)

    # VMEM budget from actual buffer sizes (x tile + resident xT + output row block,
    # each double-buffered by the pipeline) + headroom for scratch/spills.
    need = 2 * (tm * d8 + d8 * n_pad + tm * n_pad) * 4 + (4 << 20)
    vmem_limit = int(min(max(need, 8 << 20), 96 << 20))

    out_p = pl.pallas_call(
        kernel,
        out_shape=jax.ShapeDtypeStruct((n_pad, n_pad), jnp.float32),
        grid=(n_pad // tm,),
        in_specs=[
            pl.BlockSpec((tm, d8), lambda i: (i, 0)),       # row tile of x
            pl.BlockSpec((d8, n_pad), lambda i: (0, 0)),    # xT, fully VMEM-resident
            pl.BlockSpec(memory_space=pltpu.MemorySpace.SMEM),   # w  -> scalar reads
            pl.BlockSpec(memory_space=pltpu.MemorySpace.SMEM),   # bias
        ],
        out_specs=pl.BlockSpec((tm, n_pad), lambda i: (i, 0)),
        scratch_shapes=[
            pltpu.VMEM((tm, 1), jnp.float32),               # running row max
            pltpu.VMEM((tm, 1), jnp.float32),               # running row sum
        ],
        compiler_params=pltpu.CompilerParams(
            dimension_semantics=("parallel",),              # shard row tiles over TCs
            vmem_limit_bytes=vmem_limit),
    )(x_p, xT_p, w_sm, b_sm)

    return out_p[:n, :n]


if __name__ == "__main__":
    # Small shapes consistent with the module: N samples x input_dim features.
    # N deliberately not a multiple of 128 to exercise the padding/masking path.
    N, D = 100, 32

    key = jax.random.PRNGKey(0)
    kx, kw = jax.random.split(key)
    x = jax.random.normal(kx, (N, D), dtype=jnp.float32)

    # nn.Linear(D, 1) parameters: xavier_normal weight, zero bias (matches xavier_init)
    std = math.sqrt(2.0 / (D + 1))
    w_vec = std * jax.random.normal(kw, (D,), dtype=jnp.float32)
    bias = 0.0

    out = graph_learn_adaptive(x, w_vec, bias)
    out = jax.block_until_ready(out)

    # pure-JAX reference (adaptive-learning branch of GraphLearn.forward)
    diff = jnp.abs(x[:, None, :] - x[None, :, :])            # (N, N, D)
    scores = jnp.maximum(diff @ w_vec + bias, 0.0)           # relu(w(|xi-xj|))
    ref = jax.nn.softmax(scores, axis=1)

    assert out.shape == (N, N)
    assert jnp.allclose(out, ref, atol=1e-5, rtol=1e-4), float(jnp.max(jnp.abs(out - ref)))

    print("KERNEL_OK")
</pallas_src>

<mosaic_0001>
module attributes {stable_mosaic.version = 11 : i64} {
  func.func @kernel(%arg0: i32, %arg1: memref<64x32xf32, #tpu.memory_space<vmem>>, %arg2: memref<32x128xf32, #tpu.memory_space<vmem>>, %arg3: memref<32xf32, #tpu.memory_space<smem>>, %arg4: memref<1xf32, #tpu.memory_space<smem>>, %arg5: memref<64x128xf32, #tpu.memory_space<vmem>>, %arg6: memref<64x1xf32, #tpu.memory_space<vmem>>, %arg7: memref<64x1xf32, #tpu.memory_space<vmem>>) attributes {dimension_semantics = [#tpu.dimension_semantics<parallel>], iteration_bounds = array<i64: 2>, scalar_prefetch = 0 : i64, scratch_operands = 2 : i64, tpu.core_type = #tpu.core_type<tc>, window_params = [{transform_indices = @transform_0, window_bounds = array<i64: 64, 32>}, {pipeline_mode = #tpu.pipeline_mode<synchronous>, transform_indices = @transform_1, window_bounds = array<i64: 32, 128>}, {transform_indices = @transform_2, window_bounds = array<i64: 32>}, {transform_indices = @transform_3, window_bounds = array<i64: 1>}, {transform_indices = @transform_4, window_bounds = array<i64: 64, 128>}]} {
    %c0 = arith.constant 0 : index
    %0 = memref.load %arg4[%c0] : memref<1xf32, #tpu.memory_space<smem>>
    %cst = arith.constant 0xFF800000 : f32
    %1 = vector.broadcast %cst : f32 to vector<64x1xf32>
    %c0_0 = arith.constant 0 : index
    %c0_1 = arith.constant 0 : index
    %2 = vector.load %arg6[%c0_0, %c0_1] : memref<64x1xf32, #tpu.memory_space<vmem>>, vector<64x1xf32>
    tpu.vector_store %arg6[%c0_0, %c0_1], %1 {strides = array<i32>} : memref<64x1xf32, #tpu.memory_space<vmem>>, vector<64x1xf32>,
    %cst_2 = arith.constant 0.000000e+00 : f32
    %3 = vector.broadcast %cst_2 : f32 to vector<64x1xf32>
    %c0_3 = arith.constant 0 : index
    %c0_4 = arith.constant 0 : index
    %4 = vector.load %arg7[%c0_3, %c0_4] : memref<64x1xf32, #tpu.memory_space<vmem>>, vector<64x1xf32>
    tpu.vector_store %arg7[%c0_3, %c0_4], %3 {strides = array<i32>} : memref<64x1xf32, #tpu.memory_space<vmem>>, vector<64x1xf32>,
    %cst_5 = arith.constant 0.000000e+00 : f32
    %5 = vector.broadcast %cst_5 : f32 to vector<64x128xf32>
    %c0_6 = arith.constant 0 : index
    %c0_7 = arith.constant 0 : index
    %6 = vector.load %arg1[%c0_6, %c0_7] : memref<64x32xf32, #tpu.memory_space<vmem>>, vector<64x1xf32>
    %c0_8 = arith.constant 0 : index
    %c0_9 = arith.constant 0 : index
    %7 = vector.load %arg2[%c0_8, %c0_9] : memref<32x128xf32, #tpu.memory_space<vmem>>, vector<1x128xf32>
    %c0_10 = arith.constant 0 : index
    %8 = memref.load %arg3[%c0_10] : memref<32xf32, #tpu.memory_space<smem>>
    %9 = vector.broadcast %6 : vector<64x1xf32> to vector<64x128xf32>
    %10 = vector.broadcast %7 : vector<1x128xf32> to vector<64x128xf32>
    %11 = arith.subf %9, %10 : vector<64x128xf32>
    %12 = math.absf %11 : vector<64x128xf32>
    %13 = vector.broadcast %8 : f32 to vector<64x128xf32>
    %14 = arith.mulf %13, %12 : vector<64x128xf32>
    %15 = arith.addf %5, %14 : vector<64x128xf32>
    %c0_11 = arith.constant 0 : index
    %c1 = arith.constant 1 : index
    %16 = vector.load %arg1[%c0_11, %c1] : memref<64x32xf32, #tpu.memory_space<vmem>>, vector<64x1xf32>
    %c1_12 = arith.constant 1 : index
    %c0_13 = arith.constant 0 : index
    %17 = vector.load %arg2[%c1_12, %c0_13] : memref<32x128xf32, #tpu.memory_space<vmem>>, vector<1x128xf32>
    %c1_14 = arith.constant 1 : index
    %18 = memref.load %arg3[%c1_14] : memref<32xf32, #tpu.memory_space<smem>>
    %19 = vector.broadcast %16 : vector<64x1xf32> to vector<64x128xf32>
    %20 = vector.broadcast %17 : vector<1x128xf32> to vector<64x128xf32>
    %21 = arith.subf %19, %20 : vector<64x128xf32>
    %22 = math.absf %21 : vector<64x128xf32>
    %23 = vector.broadcast %18 : f32 to vector<64x128xf32>
    %24 = arith.mulf %23, %22 : vector<64x128xf32>
    %25 = arith.addf %15, %24 : vector<64x128xf32>
    %c0_15 = arith.constant 0 : index
    %c2 = arith.constant 2 : index
    %26 = vector.load %arg1[%c0_15, %c2] : memref<64x32xf32, #tpu.memory_space<vmem>>, vector<64x1xf32>
    %c2_16 = arith.constant 2 : index
    %c0_17 = arith.constant 0 : index
    %27 = vector.load %arg2[%c2_16, %c0_17] : memref<32x128xf32, #tpu.memory_space<vmem>>, vector<1x128xf32>
    %c2_18 = arith.constant 2 : index
    %28 = memref.load %arg3[%c2_18] : memref<32xf32, #tpu.memory_space<smem>>
    %29 = vector.broadcast %26 : vector<64x1xf32> to vector<64x128xf32>
    %30 = vector.broadcast %27 : vector<1x128xf32> to vector<64x128xf32>
    %31 = arith.subf %29, %30 : vector<64x128xf32>
    %32 = math.absf %31 : vector<64x128xf32>
    %33 = vector.broadcast %28 : f32 to vector<64x128xf32>
    %34 = arith.mulf %33, %32 : vector<64x128xf32>
    %35 = arith.addf %25, %34 : vector<64x128xf32>
    %c0_19 = arith.constant 0 : index
    %c3 = arith.constant 3 : index
    %36 = vector.load %arg1[%c0_19, %c3] : memref<64x32xf32, #tpu.memory_space<vmem>>, vector<64x1xf32>
    %c3_20 = arith.constant 3 : index
    %c0_21 = arith.constant 0 : index
    %37 = vector.load %arg2[%c3_20, %c0_21] : memref<32x128xf32, #tpu.memory_space<vmem>>, vector<1x128xf32>
    %c3_22 = arith.constant 3 : index
    %38 = memref.load %arg3[%c3_22] : memref<32xf32, #tpu.memory_space<smem>>
    %39 = vector.broadcast %36 : vector<64x1xf32> to vector<64x128xf32>
    %40 = vector.broadcast %37 : vector<1x128xf32> to vector<64x128xf32>
    %41 = arith.subf %39, %40 : vector<64x128xf32>
    %42 = math.absf %41 : vector<64x128xf32>
    %43 = vector.broadcast %38 : f32 to vector<64x128xf32>
    %44 = arith.mulf %43, %42 : vector<64x128xf32>
    %45 = arith.addf %35, %44 : vector<64x128xf32>
    %c0_23 = arith.constant 0 : index
    %c4 = arith.constant 4 : index
    %46 = vector.load %arg1[%c0_23, %c4] : memref<64x32xf32, #tpu.memory_space<vmem>>, vector<64x1xf32>
    %c4_24 = arith.constant 4 : index
    %c0_25 = arith.constant 0 : index
    %47 = vector.load %arg2[%c4_24, %c0_25] : memref<32x128xf32, #tpu.memory_space<vmem>>, vector<1x128xf32>
    %c4_26 = arith.constant 4 : index
    %48 = memref.load %arg3[%c4_26] : memref<32xf32, #tpu.memory_space<smem>>
    %49 = vector.broadcast %46 : vector<64x1xf32> to vector<64x128xf32>
    %50 = vector.broadcast %47 : vector<1x128xf32> to vector<64x128xf32>
    %51 = arith.subf %49, %50 : vector<64x128xf32>
    %52 = math.absf %51 : vector<64x128xf32>
    %53 = vector.broadcast %48 : f32 to vector<64x128xf32>
    %54 = arith.mulf %53, %52 : vector<64x128xf32>
    %55 = arith.addf %45, %54 : vector<64x128xf32>
    %c0_27 = arith.constant 0 : index
    %c5 = arith.constant 5 : index
    %56 = vector.load %arg1[%c0_27, %c5] : memref<64x32xf32, #tpu.memory_space<vmem>>, vector<64x1xf32>
    %c5_28 = arith.constant 5 : index
    %c0_29 = arith.constant 0 : index
    %57 = vector.load %arg2[%c5_28, %c0_29] : memref<32x128xf32, #tpu.memory_space<vmem>>, vector<1x128xf32>
    %c5_30 = arith.constant 5 : index
    %58 = memref.load %arg3[%c5_30] : memref<32xf32, #tpu.memory_space<smem>>
    %59 = vector.broadcast %56 : vector<64x1xf32> to vector<64x128xf32>
    %60 = vector.broadcast %57 : vector<1x128xf32> to vector<64x128xf32>
    %61 = arith.subf %59, %60 : vector<64x128xf32>
    %62 = math.absf %61 : vector<64x128xf32>
    %63 = vector.broadcast %58 : f32 to vector<64x128xf32>
    %64 = arith.mulf %63, %62 : vector<64x128xf32>
    %65 = arith.addf %55, %64 : vector<64x128xf32>
    %c0_31 = arith.constant 0 : index
    %c6 = arith.constant 6 : index
    %66 = vector.load %arg1[%c0_31, %c6] : memref<64x32xf32, #tpu.memory_space<vmem>>, vector<64x1xf32>
    %c6_32 = arith.constant 6 : index
    %c0_33 = arith.constant 0 : index
    %67 = vector.load %arg2[%c6_32, %c0_33] : memref<32x128xf32, #tpu.memory_space<vmem>>, vector<1x128xf32>
    %c6_34 = arith.constant 6 : index
    %68 = memref.load %arg3[%c6_34] : memref<32xf32, #tpu.memory_space<smem>>
    %69 = vector.broadcast %66 : vector<64x1xf32> to vector<64x128xf32>
    %70 = vector.broadcast %67 : vector<1x128xf32> to vector<64x128xf32>
    %71 = arith.subf %69, %70 : vector<64x128xf32>
    %72 = math.absf %71 : vector<64x128xf32>
    %73 = vector.broadcast %68 : f32 to vector<64x128xf32>
    %74 = arith.mulf %73, %72 : vector<64x128xf32>
    %75 = arith.addf %65, %74 : vector<64x128xf32>
    %c0_35 = arith.constant 0 : index
    %c7 = arith.constant 7 : index
    %76 = vector.load %arg1[%c0_35, %c7] : memref<64x32xf32, #tpu.memory_space<vmem>>, vector<64x1xf32>
    %c7_36 = arith.constant 7 : index
    %c0_37 = arith.constant 0 : index
    %77 = vector.load %arg2[%c7_36, %c0_37] : memref<32x128xf32, #tpu.memory_space<vmem>>, vector<1x128xf32>
    %c7_38 = arith.constant 7 : index
    %78 = memref.load %arg3[%c7_38] : memref<32xf32, #tpu.memory_space<smem>>
    %79 = vector.broadcast %76 : vector<64x1xf32> to vector<64x128xf32>
    %80 = vector.broadcast %77 : vector<1x128xf32> to vector<64x128xf32>
    %81 = arith.subf %79, %80 : vector<64x128xf32>
    %82 = math.absf %81 : vector<64x128xf32>
    %83 = vector.broadcast %78 : f32 to vector<64x128xf32>
    %84 = arith.mulf %83, %82 : vector<64x128xf32>
    %85 = arith.addf %75, %84 : vector<64x128xf32>
    %c0_39 = arith.constant 0 : index
    %c8 = arith.constant 8 : index
    %86 = vector.load %arg1[%c0_39, %c8] : memref<64x32xf32, #tpu.memory_space<vmem>>, vector<64x1xf32>
    %c8_40 = arith.constant 8 : index
    %c0_41 = arith.constant 0 : index
    %87 = vector.load %arg2[%c8_40, %c0_41] : memref<32x128xf32, #tpu.memory_space<vmem>>, vector<1x128xf32>
    %c8_42 = arith.constant 8 : index
    %88 = memref.load %arg3[%c8_42] : memref<32xf32, #tpu.memory_space<smem>>
    %89 = vector.broadcast %86 : vector<64x1xf32> to vector<64x128xf32>
    %90 = vector.broadcast %87 : vector<1x128xf32> to vector<64x128xf32>
    %91 = arith.subf %89, %90 : vector<64x128xf32>
    %92 = math.absf %91 : vector<64x128xf32>
    %93 = vector.broadcast %88 : f32 to vector<64x128xf32>
    %94 = arith.mulf %93, %92 : vector<64x128xf32>
    %95 = arith.addf %85, %94 : vector<64x128xf32>
    %c0_43 = arith.constant 0 : index
    %c9 = arith.constant 9 : index
    %96 = vector.load %arg1[%c0_43, %c9] : memref<64x32xf32, #tpu.memory_space<vmem>>, vector<64x1xf32>
    %c9_44 = arith.constant 9 : index
    %c0_45 = arith.constant 0 : index
    %97 = vector.load %arg2[%c9_44, %c0_45] : memref<32x128xf32, #tpu.memory_space<vmem>>, vector<1x128xf32>
    %c9_46 = arith.constant 9 : index
    %98 = memref.load %arg3[%c9_46] : memref<32xf32, #tpu.memory_space<smem>>
    %99 = vector.broadcast %96 : vector<64x1xf32> to vector<64x128xf32>
    %100 = vector.broadcast %97 : vector<1x128xf32> to vector<64x128xf32>
    %101 = arith.subf %99, %100 : vector<64x128xf32>
    %102 = math.absf %101 : vector<64x128xf32>
    %103 = vector.broadcast %98 : f32 to vector<64x128xf32>
    %104 = arith.mulf %103, %102 : vector<64x128xf32>
    %105 = arith.addf %95, %104 : vector<64x128xf32>
    %c0_47 = arith.constant 0 : index
    %c10 = arith.constant 10 : index
    %106 = vector.load %arg1[%c0_47, %c10] : memref<64x32xf32, #tpu.memory_space<vmem>>, vector<64x1xf32>
    %c10_48 = arith.constant 10 : index
    %c0_49 = arith.constant 0 : index
    %107 = vector.load %arg2[%c10_48, %c0_49] : memref<32x128xf32, #tpu.memory_space<vmem>>, vector<1x128xf32>
    %c10_50 = arith.constant 10 : index
    %108 = memref.load %arg3[%c10_50] : memref<32xf32, #tpu.memory_space<smem>>
    %109 = vector.broadcast %106 : vector<64x1xf32> to vector<64x128xf32>
    %110 = vector.broadcast %107 : vector<1x128xf32> to vector<64x128xf32>
    %111 = arith.subf %109, %110 : vector<64x128xf32>
    %112 = math.absf %111 : vector<64x128xf32>
    %113 = vector.broadcast %108 : f32 to vector<64x128xf32>
    %114 = arith.mulf %113, %112 : vector<64x128xf32>
    %115 = arith.addf %105, %114 : vector<64x128xf32>
    %c0_51 = arith.constant 0 : index
    %c11 = arith.constant 11 : index
    %116 = vector.load %arg1[%c0_51, %c11] : memref<64x32xf32, #tpu.memory_space<vmem>>, vector<64x1xf32>
    %c11_52 = arith.constant 11 : index
    %c0_53 = arith.constant 0 : index
    %117 = vector.load %arg2[%c11_52, %c0_53] : memref<32x128xf32, #tpu.memory_space<vmem>>, vector<1x128xf32>
    %c11_54 = arith.constant 11 : index
    %118 = memref.load %arg3[%c11_54] : memref<32xf32, #tpu.memory_space<smem>>
    %119 = vector.broadcast %116 : vector<64x1xf32> to vector<64x128xf32>
    %120 = vector.broadcast %117 : vector<1x128xf32> to vector<64x128xf32>
    %121 = arith.subf %119, %120 : vector<64x128xf32>
    %122 = math.absf %121 : vector<64x128xf32>
    %123 = vector.broadcast %118 : f32 to vector<64x128xf32>
    %124 = arith.mulf %123, %122 : vector<64x128xf32>
    %125 = arith.addf %115, %124 : vector<64x128xf32>
    %c0_55 = arith.constant 0 : index
    %c12 = arith.constant 12 : index
    %126 = vector.load %arg1[%c0_55, %c12] : memref<64x32xf32, #tpu.memory_space<vmem>>, vector<64x1xf32>
    %c12_56 = arith.constant 12 : index
    %c0_57 = arith.constant 0 : index
    %127 = vector.load %arg2[%c12_56, %c0_57] : memref<32x128xf32, #tpu.memory_space<vmem>>, vector<1x128xf32>
    %c12_58 = arith.constant 12 : index
    %128 = memref.load %arg3[%c12_58] : memref<32xf32, #tpu.memory_space<smem>>
    %129 = vector.broadcast %126 : vector<64x1xf32> to vector<64x128xf32>
    %130 = vector.broadcast %127 : vector<1x128xf32> to vector<64x128xf32>
    %131 = arith.subf %129, %130 : vector<64x128xf32>
    %132 = math.absf %131 : vector<64x128xf32>
    %133 = vector.broadcast %128 : f32 to vector<64x128xf32>
    %134 = arith.mulf %133, %132 : vector<64x128xf32>
    %135 = arith.addf %125, %134 : vector<64x128xf32>
    %c0_59 = arith.constant 0 : index
    %c13 = arith.constant 13 : index
    %136 = vector.load %arg1[%c0_59, %c13] : memref<64x32xf32, #tpu.memory_space<vmem>>, vector<64x1xf32>
    %c13_60 = arith.constant 13 : index
    %c0_61 = arith.constant 0 : index
    %137 = vector.load %arg2[%c13_60, %c0_61] : memref<32x128xf32, #tpu.memory_space<vmem>>, vector<1x128xf32>
    %c13_62 = arith.constant 13 : index
    %138 = memref.load %arg3[%c13_62] : memref<32xf32, #tpu.memory_space<smem>>
    %139 = vector.broadcast %136 : vector<64x1xf32> to vector<64x128xf32>
    %140 = vector.broadcast %137 : vector<1x128xf32> to vector<64x128xf32>
    %141 = arith.subf %139, %140 : vector<64x128xf32>
    %142 = math.absf %141 : vector<64x128xf32>
    %143 = vector.broadcast %138 : f32 to vector<64x128xf32>
    %144 = arith.mulf %143, %142 : vector<64x128xf32>
    %145 = arith.addf %135, %144 : vector<64x128xf32>
    %c0_63 = arith.constant 0 : index
    %c14 = arith.constant 14 : index
    %146 = vector.load %arg1[%c0_63, %c14] : memref<64x32xf32, #tpu.memory_space<vmem>>, vector<64x1xf32>
    %c14_64 = arith.constant 14 : index
    %c0_65 = arith.constant 0 : index
    %147 = vector.load %arg2[%c14_64, %c0_65] : memref<32x128xf32, #tpu.memory_space<vmem>>, vector<1x128xf32>
    %c14_66 = arith.constant 14 : index
    %148 = memref.load %arg3[%c14_66] : memref<32xf32, #tpu.memory_space<smem>>
    %149 = vector.broadcast %146 : vector<64x1xf32> to vector<64x128xf32>
    %150 = vector.broadcast %147 : vector<1x128xf32> to vector<64x128xf32>
    %151 = arith.subf %149, %150 : vector<64x128xf32>
    %152 = math.absf %151 : vector<64x128xf32>
    %153 = vector.broadcast %148 : f32 to vector<64x128xf32>
    %154 = arith.mulf %153, %152 : vector<64x128xf32>
    %155 = arith.addf %145, %154 : vector<64x128xf32>
    %c0_67 = arith.constant 0 : index
    %c15 = arith.constant 15 : index
    %156 = vector.load %arg1[%c0_67, %c15] : memref<64x32xf32, #tpu.memory_space<vmem>>, vector<64x1xf32>
    %c15_68 = arith.constant 15 : index
    %c0_69 = arith.constant 0 : index
    %157 = vector.load %arg2[%c15_68, %c0_69] : memref<32x128xf32, #tpu.memory_space<vmem>>, vector<1x128xf32>
    %c15_70 = arith.constant 15 : index
    %158 = memref.load %arg3[%c15_70] : memref<32xf32, #tpu.memory_space<smem>>
    %159 = vector.broadcast %156 : vector<64x1xf32> to vector<64x128xf32>
    %160 = vector.broadcast %157 : vector<1x128xf32> to vector<64x128xf32>
    %161 = arith.subf %159, %160 : vector<64x128xf32>
    %162 = math.absf %161 : vector<64x128xf32>
    %163 = vector.broadcast %158 : f32 to vector<64x128xf32>
    %164 = arith.mulf %163, %162 : vector<64x128xf32>
    %165 = arith.addf %155, %164 : vector<64x128xf32>
    %c0_71 = arith.constant 0 : index
    %c16 = arith.constant 16 : index
    %166 = vector.load %arg1[%c0_71, %c16] : memref<64x32xf32, #tpu.memory_space<vmem>>, vector<64x1xf32>
    %c16_72 = arith.constant 16 : index
    %c0_73 = arith.constant 0 : index
    %167 = vector.load %arg2[%c16_72, %c0_73] : memref<32x128xf32, #tpu.memory_space<vmem>>, vector<1x128xf32>
    %c16_74 = arith.constant 16 : index
    %168 = memref.load %arg3[%c16_74] : memref<32xf32, #tpu.memory_space<smem>>
    %169 = vector.broadcast %166 : vector<64x1xf32> to vector<64x128xf32>
    %170 = vector.broadcast %167 : vector<1x128xf32> to vector<64x128xf32>
    %171 = arith.subf %169, %170 : vector<64x128xf32>
    %172 = math.absf %171 : vector<64x128xf32>
    %173 = vector.broadcast %168 : f32 to vector<64x128xf32>
    %174 = arith.mulf %173, %172 : vector<64x128xf32>
    %175 = arith.addf %165, %174 : vector<64x128xf32>
    %c0_75 = arith.constant 0 : index
    %c17 = arith.constant 17 : index
    %176 = vector.load %arg1[%c0_75, %c17] : memref<64x32xf32, #tpu.memory_space<vmem>>, vector<64x1xf32>
    %c17_76 = arith.constant 17 : index
    %c0_77 = arith.constant 0 : index
    %177 = vector.load %arg2[%c17_76, %c0_77] : memref<32x128xf32, #tpu.memory_space<vmem>>, vector<1x128xf32>
    %c17_78 = arith.constant 17 : index
    %178 = memref.load %arg3[%c17_78] : memref<32xf32, #tpu.memory_space<smem>>
    %179 = vector.broadcast %176 : vector<64x1xf32> to vector<64x128xf32>
    %180 = vector.broadcast %177 : vector<1x128xf32> to vector<64x128xf32>
    %181 = arith.subf %179, %180 : vector<64x128xf32>
    %182 = math.absf %181 : vector<64x128xf32>
    %183 = vector.broadcast %178 : f32 to vector<64x128xf32>
    %184 = arith.mulf %183, %182 : vector<64x128xf32>
    %185 = arith.addf %175, %184 : vector<64x128xf32>
    %c0_79 = arith.constant 0 : index
    %c18 = arith.constant 18 : index
    %186 = vector.load %arg1[%c0_79, %c18] : memref<64x32xf32, #tpu.memory_space<vmem>>, vector<64x1xf32>
    %c18_80 = arith.constant 18 : index
    %c0_81 = arith.constant 0 : index
    %187 = vector.load %arg2[%c18_80, %c0_81] : memref<32x128xf32, #tpu.memory_space<vmem>>, vector<1x128xf32>
    %c18_82 = arith.constant 18 : index
    %188 = memref.load %arg3[%c18_82] : memref<32xf32, #tpu.memory_space<smem>>
    %189 = vector.broadcast %186 : vector<64x1xf32> to vector<64x128xf32>
    %190 = vector.broadcast %187 : vector<1x128xf32> to vector<64x128xf32>
    %191 = arith.subf %189, %190 : vector<64x128xf32>
    %192 = math.absf %191 : vector<64x128xf32>
    %193 = vector.broadcast %188 : f32 to vector<64x128xf32>
    %194 = arith.mulf %193, %192 : vector<64x128xf32>
    %195 = arith.addf %185, %194 : vector<64x128xf32>
    %c0_83 = arith.constant 0 : index
    %c19 = arith.constant 19 : index
    %196 = vector.load %arg1[%c0_83, %c19] : memref<64x32xf32, #tpu.memory_space<vmem>>, vector<64x1xf32>
    %c19_84 = arith.constant 19 : index
    %c0_85 = arith.constant 0 : index
    %197 = vector.load %arg2[%c19_84, %c0_85] : memref<32x128xf32, #tpu.memory_space<vmem>>, vector<1x128xf32>
    %c19_86 = arith.constant 19 : index
    %198 = memref.load %arg3[%c19_86] : memref<32xf32, #tpu.memory_space<smem>>
    %199 = vector.broadcast %196 : vector<64x1xf32> to vector<64x128xf32>
    %200 = vector.broadcast %197 : vector<1x128xf32> to vector<64x128xf32>
    %201 = arith.subf %199, %200 : vector<64x128xf32>
    %202 = math.absf %201 : vector<64x128xf32>
    %203 = vector.broadcast %198 : f32 to vector<64x128xf32>
    %204 = arith.mulf %203, %202 : vector<64x128xf32>
    %205 = arith.addf %195, %204 : vector<64x128xf32>
    %c0_87 = arith.constant 0 : index
    %c20 = arith.constant 20 : index
    %206 = vector.load %arg1[%c0_87, %c20] : memref<64x32xf32, #tpu.memory_space<vmem>>, vector<64x1xf32>
    %c20_88 = arith.constant 20 : index
    %c0_89 = arith.constant 0 : index
    %207 = vector.load %arg2[%c20_88, %c0_89] : memref<32x128xf32, #tpu.memory_space<vmem>>, vector<1x128xf32>
    %c20_90 = arith.constant 20 : index
    %208 = memref.load %arg3[%c20_90] : memref<32xf32, #tpu.memory_space<smem>>
    %209 = vector.broadcast %206 : vector<64x1xf32> to vector<64x128xf32>
    %210 = vector.broadcast %207 : vector<1x128xf32> to vector<64x128xf32>
    %211 = arith.subf %209, %210 : vector<64x128xf32>
    %212 = math.absf %211 : vector<64x128xf32>
    %213 = vector.broadcast %208 : f32 to vector<64x128xf32>
    %214 = arith.mulf %213, %212 : vector<64x128xf32>
    %215 = arith.addf %205, %214 : vector<64x128xf32>
    %c0_91 = arith.constant 0 : index
    %c21 = arith.constant 21 : index
    %216 = vector.load %arg1[%c0_91, %c21] : memref<64x32xf32, #tpu.memory_space<vmem>>, vector<64x1xf32>
    %c21_92 = arith.constant 21 : index
    %c0_93 = arith.constant 0 : index
    %217 = vector.load %arg2[%c21_92, %c0_93] : memref<32x128xf32, #tpu.memory_space<vmem>>, vector<1x128xf32>
    %c21_94 = arith.constant 21 : index
    %218 = memref.load %arg3[%c21_94] : memref<32xf32, #tpu.memory_space<smem>>
    %219 = vector.broadcast %216 : vector<64x1xf32> to vector<64x128xf32>
    %220 = vector.broadcast %217 : vector<1x128xf32> to vector<64x128xf32>
    %221 = arith.subf %219, %220 : vector<64x128xf32>
    %222 = math.absf %221 : vector<64x128xf32>
    %223 = vector.broadcast %218 : f32 to vector<64x128xf32>
    %224 = arith.mulf %223, %222 : vector<64x128xf32>
    %225 = arith.addf %215, %224 : vector<64x128xf32>
    %c0_95 = arith.constant 0 : index
    %c22 = arith.constant 22 : index
    %226 = vector.load %arg1[%c0_95, %c22] : memref<64x32xf32, #tpu.memory_space<vmem>>, vector<64x1xf32>
    %c22_96 = arith.constant 22 : index
    %c0_97 = arith.constant 0 : index
    %227 = vector.load %arg2[%c22_96, %c0_97] : memref<32x128xf32, #tpu.memory_space<vmem>>, vector<1x128xf32>
    %c22_98 = arith.constant 22 : index
    %228 = memref.load %arg3[%c22_98] : memref<32xf32, #tpu.memory_space<smem>>
    %229 = vector.broadcast %226 : vector<64x1xf32> to vector<64x128xf32>
    %230 = vector.broadcast %227 : vector<1x128xf32> to vector<64x128xf32>
    %231 = arith.subf %229, %230 : vector<64x128xf32>
    %232 = math.absf %231 : vector<64x128xf32>
    %233 = vector.broadcast %228 : f32 to vector<64x128xf32>
    %234 = arith.mulf %233, %232 : vector<64x128xf32>
    %235 = arith.addf %225, %234 : vector<64x128xf32>
    %c0_99 = arith.constant 0 : index
    %c23 = arith.constant 23 : index
    %236 = vector.load %arg1[%c0_99, %c23] : memref<64x32xf32, #tpu.memory_space<vmem>>, vector<64x1xf32>
    %c23_100 = arith.constant 23 : index
    %c0_101 = arith.constant 0 : index
    %237 = vector.load %arg2[%c23_100, %c0_101] : memref<32x128xf32, #tpu.memory_space<vmem>>, vector<1x128xf32>
    %c23_102 = arith.constant 23 : index
    %238 = memref.load %arg3[%c23_102] : memref<32xf32, #tpu.memory_space<smem>>
    %239 = vector.broadcast %236 : vector<64x1xf32> to vector<64x128xf32>
    %240 = vector.broadcast %237 : vector<1x128xf32> to vector<64x128xf32>
    %241 = arith.subf %239, %240 : vector<64x128xf32>
    %242 = math.absf %241 : vector<64x128xf32>
    %243 = vector.broadcast %238 : f32 to vector<64x128xf32>
    %244 = arith.mulf %243, %242 : vector<64x128xf32>
    %245 = arith.addf %235, %244 : vector<64x128xf32>
    %c0_103 = arith.constant 0 : index
    %c24 = arith.constant 24 : index
    %246 = vector.load %arg1[%c0_103, %c24] : memref<64x32xf32, #tpu.memory_space<vmem>>, vector<64x1xf32>
    %c24_104 = arith.constant 24 : index
    %c0_105 = arith.constant 0 : index
    %247 = vector.load %arg2[%c24_104, %c0_105] : memref<32x128xf32, #tpu.memory_space<vmem>>, vector<1x128xf32>
    %c24_106 = arith.constant 24 : index
    %248 = memref.load %arg3[%c24_106] : memref<32xf32, #tpu.memory_space<smem>>
    %249 = vector.broadcast %246 : vector<64x1xf32> to vector<64x128xf32>
    %250 = vector.broadcast %247 : vector<1x128xf32> to vector<64x128xf32>
    %251 = arith.subf %249, %250 : vector<64x128xf32>
    %252 = math.absf %251 : vector<64x128xf32>
    %253 = vector.broadcast %248 : f32 to vector<64x128xf32>
    %254 = arith.mulf %253, %252 : vector<64x128xf32>
    %255 = arith.addf %245, %254 : vector<64x128xf32>
    %c0_107 = arith.constant 0 : index
    %c25 = arith.constant 25 : index
    %256 = vector.load %arg1[%c0_107, %c25] : memref<64x32xf32, #tpu.memory_space<vmem>>, vector<64x1xf32>
    %c25_108 = arith.constant 25 : index
    %c0_109 = arith.constant 0 : index
    %257 = vector.load %arg2[%c25_108, %c0_109] : memref<32x128xf32, #tpu.memory_space<vmem>>, vector<1x128xf32>
    %c25_110 = arith.constant 25 : index
    %258 = memref.load %arg3[%c25_110] : memref<32xf32, #tpu.memory_space<smem>>
    %259 = vector.broadcast %256 : vector<64x1xf32> to vector<64x128xf32>
    %260 = vector.broadcast %257 : vector<1x128xf32> to vector<64x128xf32>
    %261 = arith.subf %259, %260 : vector<64x128xf32>
    %262 = math.absf %261 : vector<64x128xf32>
    %263 = vector.broadcast %258 : f32 to vector<64x128xf32>
    %264 = arith.mulf %263, %262 : vector<64x128xf32>
    %265 = arith.addf %255, %264 : vector<64x128xf32>
    %c0_111 = arith.constant 0 : index
    %c26 = arith.constant 26 : index
    %266 = vector.load %arg1[%c0_111, %c26] : memref<64x32xf32, #tpu.memory_space<vmem>>, vector<64x1xf32>
    %c26_112 = arith.constant 26 : index
    %c0_113 = arith.constant 0 : index
    %267 = vector.load %arg2[%c26_112, %c0_113] : memref<32x128xf32, #tpu.memory_space<vmem>>, vector<1x128xf32>
    %c26_114 = arith.constant 26 : index
    %268 = memref.load %arg3[%c26_114] : memref<32xf32, #tpu.memory_space<smem>>
    %269 = vector.broadcast %266 : vector<64x1xf32> to vector<64x128xf32>
    %270 = vector.broadcast %267 : vector<1x128xf32> to vector<64x128xf32>
    %271 = arith.subf %269, %270 : vector<64x128xf32>
    %272 = math.absf %271 : vector<64x128xf32>
    %273 = vector.broadcast %268 : f32 to vector<64x128xf32>
    %274 = arith.mulf %273, %272 : vector<64x128xf32>
    %275 = arith.addf %265, %274 : vector<64x128xf32>
    %c0_115 = arith.constant 0 : index
    %c27 = arith.constant 27 : index
    %276 = vector.load %arg1[%c0_115, %c27] : memref<64x32xf32, #tpu.memory_space<vmem>>, vector<64x1xf32>
    %c27_116 = arith.constant 27 : index
    %c0_117 = arith.constant 0 : index
    %277 = vector.load %arg2[%c27_116, %c0_117] : memref<32x128xf32, #tpu.memory_space<vmem>>, vector<1x128xf32>
    %c27_118 = arith.constant 27 : index
    %278 = memref.load %arg3[%c27_118] : memref<32xf32, #tpu.memory_space<smem>>
    %279 = vector.broadcast %276 : vector<64x1xf32> to vector<64x128xf32>
    %280 = vector.broadcast %277 : vector<1x128xf32> to vector<64x128xf32>
    %281 = arith.subf %279, %280 : vector<64x128xf32>
    %282 = math.absf %281 : vector<64x128xf32>
    %283 = vector.broadcast %278 : f32 to vector<64x128xf32>
    %284 = arith.mulf %283, %282 : vector<64x128xf32>
    %285 = arith.addf %275, %284 : vector<64x128xf32>
    %c0_119 = arith.constant 0 : index
    %c28 = arith.constant 28 : index
    %286 = vector.load %arg1[%c0_119, %c28] : memref<64x32xf32, #tpu.memory_space<vmem>>, vector<64x1xf32>
    %c28_120 = arith.constant 28 : index
    %c0_121 = arith.constant 0 : index
    %287 = vector.load %arg2[%c28_120, %c0_121] : memref<32x128xf32, #tpu.memory_space<vmem>>, vector<1x128xf32>
    %c28_122 = arith.constant 28 : index
    %288 = memref.load %arg3[%c28_122] : memref<32xf32, #tpu.memory_space<smem>>
    %289 = vector.broadcast %286 : vector<64x1xf32> to vector<64x128xf32>
    %290 = vector.broadcast %287 : vector<1x128xf32> to vector<64x128xf32>
    %291 = arith.subf %289, %290 : vector<64x128xf32>
    %292 = math.absf %291 : vector<64x128xf32>
    %293 = vector.broadcast %288 : f32 to vector<64x128xf32>
    %294 = arith.mulf %293, %292 : vector<64x128xf32>
    %295 = arith.addf %285, %294 : vector<64x128xf32>
    %c0_123 = arith.constant 0 : index
    %c29 = arith.constant 29 : index
    %296 = vector.load %arg1[%c0_123, %c29] : memref<64x32xf32, #tpu.memory_space<vmem>>, vector<64x1xf32>
    %c29_124 = arith.constant 29 : index
    %c0_125 = arith.constant 0 : index
    %297 = vector.load %arg2[%c29_124, %c0_125] : memref<32x128xf32, #tpu.memory_space<vmem>>, vector<1x128xf32>
    %c29_126 = arith.constant 29 : index
    %298 = memref.load %arg3[%c29_126] : memref<32xf32, #tpu.memory_space<smem>>
    %299 = vector.broadcast %296 : vector<64x1xf32> to vector<64x128xf32>
    %300 = vector.broadcast %297 : vector<1x128xf32> to vector<64x128xf32>
    %301 = arith.subf %299, %300 : vector<64x128xf32>
    %302 = math.absf %301 : vector<64x128xf32>
    %303 = vector.broadcast %298 : f32 to vector<64x128xf32>
    %304 = arith.mulf %303, %302 : vector<64x128xf32>
    %305 = arith.addf %295, %304 : vector<64x128xf32>
    %c0_127 = arith.constant 0 : index
    %c30 = arith.constant 30 : index
    %306 = vector.load %arg1[%c0_127, %c30] : memref<64x32xf32, #tpu.memory_space<vmem>>, vector<64x1xf32>
    %c30_128 = arith.constant 30 : index
    %c0_129 = arith.constant 0 : index
    %307 = vector.load %arg2[%c30_128, %c0_129] : memref<32x128xf32, #tpu.memory_space<vmem>>, vector<1x128xf32>
    %c30_130 = arith.constant 30 : index
    %308 = memref.load %arg3[%c30_130] : memref<32xf32, #tpu.memory_space<smem>>
    %309 = vector.broadcast %306 : vector<64x1xf32> to vector<64x128xf32>
    %310 = vector.broadcast %307 : vector<1x128xf32> to vector<64x128xf32>
    %311 = arith.subf %309, %310 : vector<64x128xf32>
    %312 = math.absf %311 : vector<64x128xf32>
    %313 = vector.broadcast %308 : f32 to vector<64x128xf32>
    %314 = arith.mulf %313, %312 : vector<64x128xf32>
    %315 = arith.addf %305, %314 : vector<64x128xf32>
    %c0_131 = arith.constant 0 : index
    %c31 = arith.constant 31 : index
    %316 = vector.load %arg1[%c0_131, %c31] : memref<64x32xf32, #tpu.memory_space<vmem>>, vector<64x1xf32>
    %c31_132 = arith.constant 31 : index
    %c0_133 = arith.constant 0 : index
    %317 = vector.load %arg2[%c31_132, %c0_133] : memref<32x128xf32, #tpu.memory_space<vmem>>, vector<1x128xf32>
    %c31_134 = arith.constant 31 : index
    %318 = memref.load %arg3[%c31_134] : memref<32xf32, #tpu.memory_space<smem>>
    %319 = vector.broadcast %316 : vector<64x1xf32> to vector<64x128xf32>
    %320 = vector.broadcast %317 : vector<1x128xf32> to vector<64x128xf32>
    %321 = arith.subf %319, %320 : vector<64x128xf32>
    %322 = math.absf %321 : vector<64x128xf32>
    %323 = vector.broadcast %318 : f32 to vector<64x128xf32>
    %324 = arith.mulf %323, %322 : vector<64x128xf32>
    %325 = arith.addf %315, %324 : vector<64x128xf32>
    %326 = vector.broadcast %0 : f32 to vector<64x128xf32>
    %327 = arith.addf %325, %326 : vector<64x128xf32>
    %cst_135 = arith.constant 0.000000e+00 : f32
    %328 = vector.broadcast %cst_135 : f32 to vector<64x128xf32>
    %329 = arith.maximumf %327, %328 : vector<64x128xf32>
    %330 = tpu.iota {dimensions = array<i32: 1>} : vector<64x128xi32>
    %c0_i32 = arith.constant 0 : i32
    %331 = vector.broadcast %c0_i32 : i32 to vector<64x128xi32>
    %332 = arith.addi %331, %330 : vector<64x128xi32>
    %c100_i32 = arith.constant 100 : i32
    %333 = vector.broadcast %c100_i32 : i32 to vector<64x128xi32>
    %334 = arith.cmpi slt, %332, %333 : vector<64x128xi32>
    %cst_136 = arith.constant 0xFF800000 : f32
    %335 = vector.broadcast %cst_136 : f32 to vector<64x128xf32>
    %336 = arith.select %334, %329, %335 : vector<64x128xi1>, vector<64x128xf32>
    %c0_137 = arith.constant 0 : index
    %c0_138 = arith.constant 0 : index
    %337 = vector.load %arg5[%c0_137, %c0_138] : memref<64x128xf32, #tpu.memory_space<vmem>>, vector<64x128xf32>
    tpu.vector_store %arg5[%c0_137, %c0_138], %336 {strides = array<i32>} : memref<64x128xf32, #tpu.memory_space<vmem>>, vector<64x128xf32>,
    %c0_139 = arith.constant 0 : index
    %c0_140 = arith.constant 0 : index
    %338 = vector.load %arg6[%c0_139, %c0_140] : memref<64x1xf32, #tpu.memory_space<vmem>>, vector<64x1xf32>
    %cst_141 = arith.constant dense<0xFF800000> : vector<64xf32>
    %339 = vector.multi_reduction <maximumf>, %336, %cst_141 [1] : vector<64x128xf32> to vector<64xf32>
    %340 = vector.shape_cast %339 : vector<64xf32> to vector<64x1xf32>
    %341 = arith.maximumf %338, %340 : vector<64x1xf32>
    %c0_142 = arith.constant 0 : index
    %c0_143 = arith.constant 0 : index
    %342 = vector.load %arg6[%c0_142, %c0_143] : memref<64x1xf32, #tpu.memory_space<vmem>>, vector<64x1xf32>
    tpu.vector_store %arg6[%c0_142, %c0_143], %341 {strides = array<i32>} : memref<64x1xf32, #tpu.memory_space<vmem>>, vector<64x1xf32>,
    %c0_144 = arith.constant 0 : index
    %c0_145 = arith.constant 0 : index
    %343 = vector.load %arg5[%c0_144, %c0_145] : memref<64x128xf32, #tpu.memory_space<vmem>>, vector<64x128xf32>
    %c0_146 = arith.constant 0 : index
    %c0_147 = arith.constant 0 : index
    %344 = vector.load %arg6[%c0_146, %c0_147] : memref<64x1xf32, #tpu.memory_space<vmem>>, vector<64x1xf32>
    %345 = vector.broadcast %344 : vector<64x1xf32> to vector<64x128xf32>
    %346 = arith.subf %343, %345 : vector<64x128xf32>
    %347 = math.exp %346 : vector<64x128xf32>
    %c0_148 = arith.constant 0 : index
    %c0_149 = arith.constant 0 : index
    %348 = vector.load %arg5[%c0_148, %c0_149] : memref<64x128xf32, #tpu.memory_space<vmem>>, vector<64x128xf32>
    tpu.vector_store %arg5[%c0_148, %c0_149], %347 {strides = array<i32>} : memref<64x128xf32, #tpu.memory_space<vmem>>, vector<64x128xf32>,
    %c0_150 = arith.constant 0 : index
    %c0_151 = arith.constant 0 : index
    %349 = vector.load %arg7[%c0_150, %c0_151] : memref<64x1xf32, #tpu.memory_space<vmem>>, vector<64x1xf32>
    %cst_152 = arith.constant dense<0.000000e+00> : vector<64xf32>
    %350 = vector.multi_reduction <add>, %347, %cst_152 [1] : vector<64x128xf32> to vector<64xf32>
    %351 = vector.shape_cast %350 : vector<64xf32> to vector<64x1xf32>
    %352 = arith.addf %349, %351 : vector<64x1xf32>
    %c0_153 = arith.constant 0 : index
    %c0_154 = arith.constant 0 : index
    %353 = vector.load %arg7[%c0_153, %c0_154] : memref<64x1xf32, #tpu.memory_space<vmem>>, vector<64x1xf32>
    tpu.vector_store %arg7[%c0_153, %c0_154], %352 {strides = array<i32>} : memref<64x1xf32, #tpu.memory_space<vmem>>, vector<64x1xf32>,
    %c0_155 = arith.constant 0 : index
    %c0_156 = arith.constant 0 : index
    %354 = vector.load %arg7[%c0_155, %c0_156] : memref<64x1xf32, #tpu.memory_space<vmem>>, vector<64x1xf32>
    %cst_157 = arith.constant 1.000000e+00 : f32
    %355 = vector.broadcast %cst_157 : f32 to vector<64x1xf32>
    %356 = arith.divf %355, %354 : vector<64x1xf32>
    %c0_158 = arith.constant 0 : index
    %c0_159 = arith.constant 0 : index
    %357 = vector.load %arg5[%c0_158, %c0_159] : memref<64x128xf32, #tpu.memory_space<vmem>>, vector<64x128xf32>
    %358 = vector.broadcast %356 : vector<64x1xf32> to vector<64x128xf32>
    %359 = arith.mulf %357, %358 : vector<64x128xf32>
    %c0_160 = arith.constant 0 : index
    %c0_161 = arith.constant 0 : index
    %360 = vector.load %arg5[%c0_160, %c0_161] : memref<64x128xf32, #tpu.memory_space<vmem>>, vector<64x128xf32>
    tpu.vector_store %arg5[%c0_160, %c0_161], %359 {strides = array<i32>} : memref<64x128xf32, #tpu.memory_space<vmem>>, vector<64x128xf32>,
    return
  }
  func.func @transform_0(%arg0: i32) -> (i32, i32) {
    %c0_i32 = arith.constant 0 : i32
    %c0_i32_0 = arith.constant 0 : i32
    return %arg0, %c0_i32 : i32, i32
  }
  func.func @transform_1(%arg0: i32) -> (i32, i32) {
    %c0_i32 = arith.constant 0 : i32
    %c0_i32_0 = arith.constant 0 : i32
    %c0_i32_1 = arith.constant 0 : i32
    return %c0_i32, %c0_i32_0 : i32, i32
  }
  func.func @transform_2(%arg0: i32) -> i32 {
    %c0_i32 = arith.constant 0 : i32
    %c0_i32_0 = arith.constant 0 : i32
    return %c0_i32 : i32
  }
  func.func @transform_3(%arg0: i32) -> i32 {
    %c0_i32 = arith.constant 0 : i32
    %c0_i32_0 = arith.constant 0 : i32
    return %c0_i32 : i32
  }
  func.func @transform_4(%arg0: i32) -> (i32, i32) {
    %c0_i32 = arith.constant 0 : i32
    %c0_i32_0 = arith.constant 0 : i32
    return %arg0, %c0_i32 : i32, i32
  }
}

</mosaic_0001>

<llo_original>
// kernel: tpu_custom_call.1
$region0: #{tpu_custom_call.1}
  #allocation0 [shape = 'u32[]', space=smem, size = 0x4, offset = 0x4, fixed_abs, tag = 'smem constant byte address 0x4 - core index']
  #allocation1 [shape = 'u32[144,128]{1,0:T(1,128)}', space=vmem, size = 0x12000, scoped, tag = 'internal scratch']
  #allocation2 [shape = 'f32[64,1]{1,0:T(8,128)}', space=vmem, size = 0x8000, scoped, tag = 'scratch operand']
  #allocation3 [shape = 'f32[64,1]{1,0:T(8,128)}', space=vmem, size = 0x8000, scoped, tag = 'scratch operand']
  #allocation4 [shape = 'f32[1]{0:T(128)S(6)}', space=smem, size = 0x200, scoped, tag = 'scoped memory for tpu_custom_call.1']
  %s0 = inlined_call_operand.vmem [shape: f32[128,32], index: 0, kind: input, shape index: {}]
  %s1 = inlined_call_operand.vmem [shape: f32[32,128], index: 1, kind: input, shape index: {}]
  %s2 = inlined_call_operand.vmem [shape: f32[32], index: 2, kind: input, shape index: {}]
  %s3 = inlined_call_operand.<no memory space> [shape: f32[1], index: 3, kind: input, shape index: {}]
  %s4 = inlined_call_operand.hbm [shape: f32[128,128], index: 4, kind: output, shape index: {}]
  %s5 = sld [smem:[#allocation0]]
  $region53: #{tpu_custom_call.1} parent=0
    _
  %s7 = ssub.s32 1, %s5
  %s8 = scalar_select 0, %s7, %s5
  %9 = sst [smem:[#allocation4]] %s3
  $region1: #{tpu_custom_call.1} parent=0
    #allocation5 [shape = 'u8[512]{0}', space=smem, size = 0x200, scoped, tag = 'input window, operand 2, single buffered']
    #allocation6 [shape = 's32[2]{0}', space=sflag, size = 0x8, scoped, tag = 'scoped memory for tpu_custom_call.1']
    #allocation7 [shape = 's32[2]{0}', space=sflag, size = 0x8, scoped, tag = 'scoped memory for tpu_custom_call.1']
    #allocation8 [shape = 'u8[65536]{0}', space=vmem, size = 0x10000, scoped, tag = 'output window, operand 0']
    %10 = vsyncpa [#allocation7], 0
    %11 = vsyncpa [#allocation6], 0
    %s12 = scalar_lea.sflag [#allocation6], 1
    %13 = vsyncpa %s12, 0
    loop: start=0, step=1, limit=4
    $region2: #{tpu_custom_call.1} parent=1 // loop_pre_header
      _
    $region3: #{tpu_custom_call.1} parent=1 // loop_header
      %s15 = sphi 0, %s19
      %p16 = scmp.ge.s32.totalorder %s15, 4
      %s25 = sphi 0, %s27
      %s28 = sphi 0, %s25
      %s29 = sphi 0, %s28
      %s45 = sphi 0, %s29
      %s49 = sphi 0, %s49
      %s51 = sphi 0, %s49
      %s52 = sphi 0, %s51
      %s66 = sphi 0, %s52
      %s70 = sphi 0, %s70
      %s72 = sphi 0, %s70
      %s73 = sphi 0, %s72
      %s87 = sphi 0, %s73
      %s91 = sphi 0, %s91
      %s93 = sphi 0, %s91
      %s94 = sphi 0, %s93
      %s108 = sphi 0, %s94
      %s114 = sphi 0, %s116
      %s117 = sphi 0, %s114
      %s118 = sphi 0, %s117
      %s134 = sphi 0, %s118
    $region4: #{tpu_custom_call.1} parent=1 // loop_header_branch
      %18 = sbr.rel (%p16) target = $region8
    $region5: #{tpu_custom_call.1} parent=1 // loop_body
      %s20 = ssub.s32 %s15, 1
      %s21 = ssub.s32 %s15, 2
      %s22 = sadd.s32 %s15, 1
      %s23 = ssub.s32 %s15, %s22
      %p24 = scmp.eq.s32.totalorder %s23, 0
      %s26 = sadd.s32 %s25, 1
      %s27 = scalar_select %p24, %s25, %s26
      %p30 = pneg %p24
      %p31 = scmp.eq.s32.totalorder %s15, 1
      %p32 = por %p30, %p31
      %p33 = scmp.ne.s32.totalorder %s25, %s28
      %p34 = scmp.eq.s32.totalorder %s15, 0
      %p35 = por %p33, %p34
      %p36 = scmp.ne.s32.totalorder %s25, %s28
      %p37 = scmp.eq.s32.totalorder %s20, 1
      %p38 = por %p36, %p37
      %p39 = scmp.ne.s32.totalorder %s28, %s29
      %p40 = scmp.eq.s32.totalorder %s20, 0
      %p41 = por %p39, %p40
      %p42 = scmp.ne.s32.totalorder %s28, %s29
      %p43 = scmp.eq.s32.totalorder %s21, 1
      %p44 = por %p42, %p43
      %p46 = scmp.ne.s32.totalorder %s29, %s45
      %p47 = scmp.eq.s32.totalorder %s21, 0
      %p48 = por %p46, %p47
      %s50 = sadd.s32 %s49, 1
      %p53 = scmp.eq.s32.totalorder %s15, 1
      %p54 = scmp.ne.s32.totalorder %s49, %s51
      %p55 = scmp.eq.s32.totalorder %s15, 0
      %p56 = por %p54, %p55
      %p57 = scmp.ne.s32.totalorder %s49, %s51
      %p58 = scmp.eq.s32.totalorder %s20, 1
      %p59 = por %p57, %p58
      %p60 = scmp.ne.s32.totalorder %s51, %s52
      %p61 = scmp.eq.s32.totalorder %s20, 0
      %p62 = por %p60, %p61
      %p63 = scmp.ne.s32.totalorder %s51, %s52
      %p64 = scmp.eq.s32.totalorder %s21, 1
      %p65 = por %p63, %p64
      %p67 = scmp.ne.s32.totalorder %s52, %s66
      %p68 = scmp.eq.s32.totalorder %s21, 0
      %p69 = por %p67, %p68
      %s71 = sadd.s32 %s70, 1
      %p74 = scmp.eq.s32.totalorder %s15, 1
      %p75 = scmp.ne.s32.totalorder %s70, %s72
      %p76 = scmp.eq.s32.totalorder %s15, 0
      %p77 = por %p75, %p76
      %p78 = scmp.ne.s32.totalorder %s70, %s72
      %p79 = scmp.eq.s32.totalorder %s20, 1
      %p80 = por %p78, %p79
      %p81 = scmp.ne.s32.totalorder %s72, %s73
      %p82 = scmp.eq.s32.totalorder %s20, 0
      %p83 = por %p81, %p82
      %p84 = scmp.ne.s32.totalorder %s72, %s73
      %p85 = scmp.eq.s32.totalorder %s21, 1
      %p86 = por %p84, %p85
      %p88 = scmp.ne.s32.totalorder %s73, %s87
      %p89 = scmp.eq.s32.totalorder %s21, 0
      %p90 = por %p88, %p89
      %s92 = sadd.s32 %s91, 1
      %p95 = scmp.eq.s32.totalorder %s15, 1
      %p96 = scmp.ne.s32.totalorder %s91, %s93
      %p97 = scmp.eq.s32.totalorder %s15, 0
      %p98 = por %p96, %p97
      %p99 = scmp.ne.s32.totalorder %s91, %s93
      %p100 = scmp.eq.s32.totalorder %s20, 1
      %p101 = por %p99, %p100
      %p102 = scmp.ne.s32.totalorder %s93, %s94
      %p103 = scmp.eq.s32.totalorder %s20, 0
      %p104 = por %p102, %p103
      %p105 = scmp.ne.s32.totalorder %s93, %s94
      %p106 = scmp.eq.s32.totalorder %s21, 1
      %p107 = por %p105, %p106
      %p109 = scmp.ne.s32.totalorder %s94, %s108
      %p110 = scmp.eq.s32.totalorder %s21, 0
      %p111 = por %p109, %p110
      %s112 = ssub.s32 %s15, %s22
      %p113 = scmp.eq.s32.totalorder %s112, 0
      %s115 = sadd.s32 %s114, 1
      %s116 = scalar_select %p113, %s114, %s115
      %p119 = pneg %p113
      %p120 = scmp.eq.s32.totalorder %s15, 1
      %p121 = por %p119, %p120
      %p122 = scmp.ne.s32.totalorder %s114, %s117
      %p123 = scmp.eq.s32.totalorder %s15, 0
      %p124 = por %p122, %p123
      %p125 = scmp.ne.s32.totalorder %s114, %s117
      %p126 = scmp.eq.s32.totalorder %s20, 1
      %p127 = por %p125, %p126
      %p128 = scmp.ne.s32.totalorder %s117, %s118
      %p129 = scmp.eq.s32.totalorder %s20, 0
      %p130 = por %p128, %p129
      %p131 = scmp.ne.s32.totalorder %s117, %s118
      %p132 = scmp.eq.s32.totalorder %s21, 1
      %p133 = por %p131, %p132
      %p135 = scmp.ne.s32.totalorder %s118, %s134
      %p136 = scmp.eq.s32.totalorder %s21, 0
      %p137 = por %p135, %p136
      %p138 = scmp.le.s32.totalorder 1, %s15
      %p139 = scmp.lt.s32.totalorder %s15, 3
      %p140 = pnand %p138, %p139
      %p141 = pneg %p140
      // Predicated region
      $region9: #{tpu_custom_call.1} parent=5 // pred_check
        _
      $region10: #{tpu_custom_call.1} parent=5 // pred_check_branch
        %143 = sbr.rel (%p140) target = $region12
      $region11: #{tpu_custom_call.1} parent=5 // pred_region
        %s144 = ssub.s32 %s15, 1
        // Predicated region
        $region13: #{tpu_custom_call.1} parent=11 // pred_check
          %p145 = pneg %p62
        $region14: #{tpu_custom_call.1} parent=11 // pred_check_branch
          %147 = sbr.rel (%p145) target = $region16
        $region15: #{tpu_custom_call.1} parent=11 // pred_region
          _
        $region16: #{tpu_custom_call.1} parent=11 // pred_fallthru
          _
        // Predicated region
        $region17: #{tpu_custom_call.1} parent=11 // pred_check
          %p148 = pneg %p83
        $region18: #{tpu_custom_call.1} parent=11 // pred_check_branch
          %150 = sbr.rel (%p148) target = $region20
        $region19: #{tpu_custom_call.1} parent=11 // pred_region
          %s152 = ssub.s32 16, 16
          %153 = vsyncadd [#allocation7], %s152
          %s155 = sshll.u32 %s2, 4
          %s156 = int_to_ptr.vmem [resolvable:$true] %s155
          %158 = dma.vmem_to_smem %s156, 16, [#allocation5], [#allocation7]
        $region20: #{tpu_custom_call.1} parent=11 // pred_fallthru
          _
        // Predicated region
        $region21: #{tpu_custom_call.1} parent=11 // pred_check
          %p159 = pneg %p104
        $region22: #{tpu_custom_call.1} parent=11 // pred_check_branch
          %161 = sbr.rel (%p159) target = $region24
        $region23: #{tpu_custom_call.1} parent=11 // pred_region
          _
        $region24: #{tpu_custom_call.1} parent=11 // pred_fallthru
          _
      $region12: #{tpu_custom_call.1} parent=5 // pred_fallthru
        _
      %p162 = scmp.lt.s32.totalorder %s15, 2
      // Predicated region
      $region25: #{tpu_custom_call.1} parent=5 // pred_check
        %p163 = pneg %p162
      $region26: #{tpu_custom_call.1} parent=5 // pred_check_branch
        %165 = sbr.rel (%p163) target = $region28
      $region27: #{tpu_custom_call.1} parent=5 // pred_region
        // Predicated region
        $region29: #{tpu_custom_call.1} parent=27 // pred_check
          %p166 = pneg %p35
        $region30: #{tpu_custom_call.1} parent=27 // pred_check_branch
          %168 = sbr.rel (%p166) target = $region32
        $region31: #{tpu_custom_call.1} parent=27 // pred_region
          %s169 = smul.u32 8, %s15
          %p170 = scmp.lt.s32.totalorder %s169, 15
          %s171 = scalar_select %p170, %s169, 15
          %s172 = smul.addr %s171, 8
          %s173 = scalar_lea.vmem %s0, %s172
          %s174 = smul.u32 8, %s15
        $region32: #{tpu_custom_call.1} parent=27 // pred_fallthru
          _
      $region28: #{tpu_custom_call.1} parent=5 // pred_fallthru
        _
      %p175 = scmp.le.s32.totalorder 1, %s15
      %p176 = scmp.lt.s32.totalorder %s15, 3
      %p177 = pnand %p175, %p176
      %p178 = pneg %p177
      // Predicated region
      $region33: #{tpu_custom_call.1} parent=5 // pred_check
        _
      $region34: #{tpu_custom_call.1} parent=5 // pred_check_branch
        %180 = sbr.rel (%p177) target = $region36
      $region35: #{tpu_custom_call.1} parent=5 // pred_region
        %s181 = ssub.s32 %s15, 1
        // Predicated region
        $region37: #{tpu_custom_call.1} parent=35 // pred_check
          %p182 = pneg %p83
        $region38: #{tpu_custom_call.1} parent=35 // pred_check_branch
          %184 = sbr.rel (%p182) target = $region40
        $region39: #{tpu_custom_call.1} parent=35 // pred_region
          %185 = dma.done [#allocation7], 16
        $region40: #{tpu_custom_call.1} parent=35 // pred_fallthru
          _
        %186 = sfence
        %s187 = smul.u32 8, %s20
        %p188 = scmp.lt.s32.totalorder %s187, 15
        %s189 = scalar_select %p188, %s187, 15
        %s190 = smul.addr %s189, 8
        %s191 = scalar_lea.vmem %s0, %s190
        %p192 = pneg %p41
        %p193 = pneg %p38
        %p194 = pneg %p62
        %p195 = pneg %p59
        %p196 = pneg %p83
        %p197 = pneg %p80
        %p198 = pneg %p104
        %p199 = pneg %p101
        %p200 = pneg %p130
        %p201 = pneg %p127
        %s202 = sand.u32 %s117, 1
        %s203 = scalar_lea.sflag [#allocation6], %s202
        %s204 = sand.u32 %s117, 1
        %s205 = smul.addr %s204, 64
        %s206 = scalar_lea.vmem [#allocation8], %s205
        %s207 = smul.u32 8, %s20
        %p208 = scmp.lt.s32.totalorder %s207, 15
        %s209 = scalar_select %p208, %s207, 15
        %s210 = smul.addr %s209, 8
        %s211 = scalar_lea.vmem %s0, %s210
        %s212 = smul.u32 8, %s20
        %s213 = smul.u32 8, %s20
        %s214 = sld [smem:[#allocation4]]
        %vm215 = vcmask 7168
        %216 = vst.msk [vmem:[#allocation2] sm:$0xff] %vm215, -inf
        %217 = vst.msk [vmem:[#allocation2 + $0x8] sm:$0xff] %vm215, -inf
        %218 = vst.msk [vmem:[#allocation2 + $0x10] sm:$0xff] %vm215, -inf
        %219 = vst.msk [vmem:[#allocation2 + $0x18] sm:$0xff] %vm215, -inf
        %220 = vst.msk [vmem:[#allocation2 + $0x20] sm:$0xff] %vm215, -inf
        %221 = vst.msk [vmem:[#allocation2 + $0x28] sm:$0xff] %vm215, -inf
        %222 = vst.msk [vmem:[#allocation2 + $0x30] sm:$0xff] %vm215, -inf
        %223 = vst.msk [vmem:[#allocation2 + $0x38] sm:$0xff] %vm215, -inf
        %224 = vst.msk [vmem:[#allocation3] sm:$0xff] %vm215, 0.0
        %225 = vst.msk [vmem:[#allocation3 + $0x8] sm:$0xff] %vm215, 0.0
        %226 = vst.msk [vmem:[#allocation3 + $0x10] sm:$0xff] %vm215, 0.0
        %227 = vst.msk [vmem:[#allocation3 + $0x18] sm:$0xff] %vm215, 0.0
        %228 = vst.msk [vmem:[#allocation3 + $0x20] sm:$0xff] %vm215, 0.0
        %229 = vst.msk [vmem:[#allocation3 + $0x28] sm:$0xff] %vm215, 0.0
        %230 = vst.msk [vmem:[#allocation3 + $0x30] sm:$0xff] %vm215, 0.0
        %231 = vst.msk [vmem:[#allocation3 + $0x38] sm:$0xff] %vm215, 0.0
        %v232 = vld [vmem:[%s211] sm:$0xff]
        %v233 = vld [vmem:[%s211 + $0x8] sm:$0xff]
        %v234 = vld [vmem:[%s211 + $0x10] sm:$0xff]
        %v235 = vld [vmem:[%s211 + $0x18] sm:$0xff]
        %v236 = vld [vmem:[%s211 + $0x20] sm:$0xff]
        %v237 = vld [vmem:[%s211 + $0x28] sm:$0xff]
        %v238 = vld [vmem:[%s211 + $0x30] sm:$0xff]
        %v239 = vld [vmem:[%s211 + $0x38] sm:$0xff]
        %v240 = vld [vmem:[%s1] sm:$0x1]
        %s241 = sld [smem:[#allocation5]]
        %243 = vset.pattern.permute.xlu0 0
        %244 = vperm.xlu0 %243, %v232
        %v245 = vpop.permute.xlu0 %244
        %248 = vset.pattern.permute.xlu0 0
        %249 = vperm.xlu0 %248, %v233
        %v250 = vpop.permute.xlu0 %249
        %253 = vset.pattern.permute.xlu0 0
        %254 = vperm.xlu0 %253, %v234
        %v255 = vpop.permute.xlu0 %254
        %258 = vset.pattern.permute.xlu0 0
        %259 = vperm.xlu0 %258, %v235
        %v260 = vpop.permute.xlu0 %259
        %263 = vset.pattern.permute.xlu0 0
        %264 = vperm.xlu0 %263, %v236
        %v265 = vpop.permute.xlu0 %264
        %268 = vset.pattern.permute.xlu0 0
        %269 = vperm.xlu0 %268, %v237
        %v270 = vpop.permute.xlu0 %269
        %273 = vset.pattern.permute.xlu0 0
        %274 = vperm.xlu0 %273, %v238
        %v275 = vpop.permute.xlu0 %274
        %278 = vset.pattern.permute.xlu0 0
        %279 = vperm.xlu0 %278, %v239
        %v280 = vpop.permute.xlu0 %279
        %v282 = vlaneseq
        %v283 = vshrl.u32 %v282, 7
        %v284 = vsub.s32 0, %v283
        %v285 = vrot.slane %v240, %v284
        %v286 = vsub.f32 %v245, %v285
        %v287 = vsub.f32 %v250, %v285
        %v288 = vsub.f32 %v255, %v285
        %v289 = vsub.f32 %v260, %v285
        %v290 = vsub.f32 %v265, %v285
        %v291 = vsub.f32 %v270, %v285
        %v292 = vsub.f32 %v275, %v285
        %v293 = vsub.f32 %v280, %v285
        %v294 = vand.u32 2147483647, %v286
        %v295 = vand.u32 2147483647, %v287
        %v296 = vand.u32 2147483647, %v288
        %v297 = vand.u32 2147483647, %v289
        %v298 = vand.u32 2147483647, %v290
        %v299 = vand.u32 2147483647, %v291
        %v300 = vand.u32 2147483647, %v292
        %v301 = vand.u32 2147483647, %v293
        %v302 = vstv %s241
        %v303 = vmul.f32 %v302, %v294
        %v304 = vmul.f32 %v302, %v295
        %v305 = vmul.f32 %v302, %v296
        %v306 = vmul.f32 %v302, %v297
        %v307 = vmul.f32 %v302, %v298
        %v308 = vmul.f32 %v302, %v299
        %v309 = vmul.f32 %v302, %v300
        %v310 = vmul.f32 %v302, %v301
        %v311 = vadd.f32 %v303, 0.0
        %v312 = vadd.f32 %v304, 0.0
        %v313 = vadd.f32 %v305, 0.0
        %v314 = vadd.f32 %v306, 0.0
        %v315 = vadd.f32 %v307, 0.0
        %v316 = vadd.f32 %v308, 0.0
        %v317 = vadd.f32 %v309, 0.0
        %v318 = vadd.f32 %v310, 0.0
        %v319 = vld [vmem:[%s1 + $0x1] sm:$0x1]
        %s320 = sld [smem:[#allocation5 + $0x1]]
        %321 = vset.pattern.permute.xlu0 1
        %322 = vperm.xlu0 %321, %v232
        %v323 = vpop.permute.xlu0 %322
        %325 = vset.pattern.permute.xlu0 1
        %326 = vperm.xlu0 %325, %v233
        %v327 = vpop.permute.xlu0 %326
        %329 = vset.pattern.permute.xlu0 1
        %330 = vperm.xlu0 %329, %v234
        %v331 = vpop.permute.xlu0 %330
        %333 = vset.pattern.permute.xlu0 1
        %334 = vperm.xlu0 %333, %v235
        %v335 = vpop.permute.xlu0 %334
        %337 = vset.pattern.permute.xlu0 1
        %338 = vperm.xlu0 %337, %v236
        %v339 = vpop.permute.xlu0 %338
        %341 = vset.pattern.permute.xlu0 1
        %342 = vperm.xlu0 %341, %v237
        %v343 = vpop.permute.xlu0 %342
        %345 = vset.pattern.permute.xlu0 1
        %346 = vperm.xlu0 %345, %v238
        %v347 = vpop.permute.xlu0 %346
        %349 = vset.pattern.permute.xlu0 1
        %350 = vperm.xlu0 %349, %v239
        %v351 = vpop.permute.xlu0 %350
        %v353 = vlaneseq
        %v354 = vshrl.u32 %v353, 7
        %v355 = vsub.s32 0, %v354
        %v356 = vrot.slane %v319, %v355
        %v357 = vsub.f32 %v323, %v356
        %v358 = vsub.f32 %v327, %v356
        %v359 = vsub.f32 %v331, %v356
        %v360 = vsub.f32 %v335, %v356
        %v361 = vsub.f32 %v339, %v356
        %v362 = vsub.f32 %v343, %v356
        %v363 = vsub.f32 %v347, %v356
        %v364 = vsub.f32 %v351, %v356
        %v365 = vand.u32 2147483647, %v357
        %v366 = vand.u32 2147483647, %v358
        %v367 = vand.u32 2147483647, %v359
        %v368 = vand.u32 2147483647, %v360
        %v369 = vand.u32 2147483647, %v361
        %v370 = vand.u32 2147483647, %v362
        %v371 = vand.u32 2147483647, %v363
        %v372 = vand.u32 2147483647, %v364
        %v373 = vstv %s320
        %v374 = vmul.f32 %v373, %v365
        %v375 = vmul.f32 %v373, %v366
        %v376 = vmul.f32 %v373, %v367
        %v377 = vmul.f32 %v373, %v368
        %v378 = vmul.f32 %v373, %v369
        %v379 = vmul.f32 %v373, %v370
        %v380 = vmul.f32 %v373, %v371
        %v381 = vmul.f32 %v373, %v372
        %v382 = vadd.f32 %v311, %v374
        %v383 = vadd.f32 %v312, %v375
        %v384 = vadd.f32 %v313, %v376
        %v385 = vadd.f32 %v314, %v377
        %v386 = vadd.f32 %v315, %v378
        %v387 = vadd.f32 %v316, %v379
        %v388 = vadd.f32 %v317, %v380
        %v389 = vadd.f32 %v318, %v381
        %v390 = vld [vmem:[%s1 + $0x2] sm:$0x1]
        %s391 = sld [smem:[#allocation5 + $0x2]]
        %392 = vset.pattern.permute.xlu0 2
        %393 = vperm.xlu0 %392, %v232
        %v394 = vpop.permute.xlu0 %393
        %396 = vset.pattern.permute.xlu0 2
        %397 = vperm.xlu0 %396, %v233
        %v398 = vpop.permute.xlu0 %397
        %400 = vset.pattern.permute.xlu0 2
        %401 = vperm.xlu0 %400, %v234
        %v402 = vpop.permute.xlu0 %401
        %404 = vset.pattern.permute.xlu0 2
        %405 = vperm.xlu0 %404, %v235
        %v406 = vpop.permute.xlu0 %405
        %408 = vset.pattern.permute.xlu0 2
        %409 = vperm.xlu0 %408, %v236
        %v410 = vpop.permute.xlu0 %409
        %412 = vset.pattern.permute.xlu0 2
        %413 = vperm.xlu0 %412, %v237
        %v414 = vpop.permute.xlu0 %413
        %416 = vset.pattern.permute.xlu0 2
        %417 = vperm.xlu0 %416, %v238
        %v418 = vpop.permute.xlu0 %417
        %420 = vset.pattern.permute.xlu0 2
        %421 = vperm.xlu0 %420, %v239
        %v422 = vpop.permute.xlu0 %421
        %v424 = vlaneseq
        %v425 = vshrl.u32 %v424, 7
        %v426 = vsub.s32 0, %v425
        %v427 = vrot.slane %v390, %v426
        %v428 = vsub.f32 %v394, %v427
        %v429 = vsub.f32 %v398, %v427
        %v430 = vsub.f32 %v402, %v427
        %v431 = vsub.f32 %v406, %v427
        %v432 = vsub.f32 %v410, %v427
        %v433 = vsub.f32 %v414, %v427
        %v434 = vsub.f32 %v418, %v427
        %v435 = vsub.f32 %v422, %v427
        %v436 = vand.u32 2147483647, %v428
        %v437 = vand.u32 2147483647, %v429
        %v438 = vand.u32 2147483647, %v430
        %v439 = vand.u32 2147483647, %v431
        %v440 = vand.u32 2147483647, %v432
        %v441 = vand.u32 2147483647, %v433
        %v442 = vand.u32 2147483647, %v434
        %v443 = vand.u32 2147483647, %v435
        %v444 = vstv %s391
        %v445 = vmul.f32 %v444, %v436
        %v446 = vmul.f32 %v444, %v437
        %v447 = vmul.f32 %v444, %v438
        %v448 = vmul.f32 %v444, %v439
        %v449 = vmul.f32 %v444, %v440
        %v450 = vmul.f32 %v444, %v441
        %v451 = vmul.f32 %v444, %v442
        %v452 = vmul.f32 %v444, %v443
        %v453 = vadd.f32 %v382, %v445
        %v454 = vadd.f32 %v383, %v446
        %v455 = vadd.f32 %v384, %v447
        %v456 = vadd.f32 %v385, %v448
        %v457 = vadd.f32 %v386, %v449
        %v458 = vadd.f32 %v387, %v450
        %v459 = vadd.f32 %v388, %v451
        %v460 = vadd.f32 %v389, %v452
        %v461 = vld [vmem:[%s1 + $0x3] sm:$0x1]
        %s462 = sld [smem:[#allocation5 + $0x3]]
        %463 = vset.pattern.permute.xlu0 3
        %464 = vperm.xlu0 %463, %v232
        %v465 = vpop.permute.xlu0 %464
        %467 = vset.pattern.permute.xlu0 3
        %468 = vperm.xlu0 %467, %v233
        %v469 = vpop.permute.xlu0 %468
        %471 = vset.pattern.permute.xlu0 3
        %472 = vperm.xlu0 %471, %v234
        %v473 = vpop.permute.xlu0 %472
        %475 = vset.pattern.permute.xlu0 3
        %476 = vperm.xlu0 %475, %v235
        %v477 = vpop.permute.xlu0 %476
        %479 = vset.pattern.permute.xlu0 3
        %480 = vperm.xlu0 %479, %v236
        %v481 = vpop.permute.xlu0 %480
        %483 = vset.pattern.permute.xlu0 3
        %484 = vperm.xlu0 %483, %v237
        %v485 = vpop.permute.xlu0 %484
        %487 = vset.pattern.permute.xlu0 3
        %488 = vperm.xlu0 %487, %v238
        %v489 = vpop.permute.xlu0 %488
        %491 = vset.pattern.permute.xlu0 3
        %492 = vperm.xlu0 %491, %v239
        %v493 = vpop.permute.xlu0 %492
        %v495 = vlaneseq
        %v496 = vshrl.u32 %v495, 7
        %v497 = vsub.s32 0, %v496
        %v498 = vrot.slane %v461, %v497
        %v499 = vsub.f32 %v465, %v498
        %v500 = vsub.f32 %v469, %v498
        %v501 = vsub.f32 %v473, %v498
        %v502 = vsub.f32 %v477, %v498
        %v503 = vsub.f32 %v481, %v498
        %v504 = vsub.f32 %v485, %v498
        %v505 = vsub.f32 %v489, %v498
        %v506 = vsub.f32 %v493, %v498
        %v507 = vand.u32 2147483647, %v499
        %v508 = vand.u32 2147483647, %v500
        %v509 = vand.u32 2147483647, %v501
        %v510 = vand.u32 2147483647, %v502
        %v511 = vand.u32 2147483647, %v503
        %v512 = vand.u32 2147483647, %v504
        %v513 = vand.u32 2147483647, %v505
        %v514 = vand.u32 2147483647, %v506
        %v515 = vstv %s462
        %v516 = vmul.f32 %v515, %v507
        %v517 = vmul.f32 %v515, %v508
        %v518 = vmul.f32 %v515, %v509
        %v519 = vmul.f32 %v515, %v510
        %v520 = vmul.f32 %v515, %v511
        %v521 = vmul.f32 %v515, %v512
        %v522 = vmul.f32 %v515, %v513
        %v523 = vmul.f32 %v515, %v514
        %v524 = vadd.f32 %v453, %v516
        %v525 = vadd.f32 %v454, %v517
        %v526 = vadd.f32 %v455, %v518
        %v527 = vadd.f32 %v456, %v519
        %v528 = vadd.f32 %v457, %v520
        %v529 = vadd.f32 %v458, %v521
        %v530 = vadd.f32 %v459, %v522
        %v531 = vadd.f32 %v460, %v523
        %v532 = vld [vmem:[%s1 + $0x4] sm:$0x1]
        %s533 = sld [smem:[#allocation5 + $0x4]]
        %534 = vset.pattern.permute.xlu0 4
        %535 = vperm.xlu0 %534, %v232
        %v536 = vpop.permute.xlu0 %535
        %538 = vset.pattern.permute.xlu0 4
        %539 = vperm.xlu0 %538, %v233
        %v540 = vpop.permute.xlu0 %539
        %542 = vset.pattern.permute.xlu0 4
        %543 = vperm.xlu0 %542, %v234
        %v544 = vpop.permute.xlu0 %543
        %546 = vset.pattern.permute.xlu0 4
        %547 = vperm.xlu0 %546, %v235
        %v548 = vpop.permute.xlu0 %547
        %550 = vset.pattern.permute.xlu0 4
        %551 = vperm.xlu0 %550, %v236
        %v552 = vpop.permute.xlu0 %551
        %554 = vset.pattern.permute.xlu0 4
        %555 = vperm.xlu0 %554, %v237
        %v556 = vpop.permute.xlu0 %555
        %558 = vset.pattern.permute.xlu0 4
        %559 = vperm.xlu0 %558, %v238
        %v560 = vpop.permute.xlu0 %559
        %562 = vset.pattern.permute.xlu0 4
        %563 = vperm.xlu0 %562, %v239
        %v564 = vpop.permute.xlu0 %563
        %v566 = vlaneseq
        %v567 = vshrl.u32 %v566, 7
        %v568 = vsub.s32 0, %v567
        %v569 = vrot.slane %v532, %v568
        %v570 = vsub.f32 %v536, %v569
        %v571 = vsub.f32 %v540, %v569
        %v572 = vsub.f32 %v544, %v569
        %v573 = vsub.f32 %v548, %v569
        %v574 = vsub.f32 %v552, %v569
        %v575 = vsub.f32 %v556, %v569
        %v576 = vsub.f32 %v560, %v569
        %v577 = vsub.f32 %v564, %v569
        %v578 = vand.u32 2147483647, %v570
        %v579 = vand.u32 2147483647, %v571
        %v580 = vand.u32 2147483647, %v572
        %v581 = vand.u32 2147483647, %v573
        %v582 = vand.u32 2147483647, %v574
        %v583 = vand.u32 2147483647, %v575
        %v584 = vand.u32 2147483647, %v576
        %v585 = vand.u32 2147483647, %v577
        %v586 = vstv %s533
        %v587 = vmul.f32 %v586, %v578
        %v588 = vmul.f32 %v586, %v579
        %v589 = vmul.f32 %v586, %v580
        %v590 = vmul.f32 %v586, %v581
        %v591 = vmul.f32 %v586, %v582
        %v592 = vmul.f32 %v586, %v583
        %v593 = vmul.f32 %v586, %v584
        %v594 = vmul.f32 %v586, %v585
        %v595 = vadd.f32 %v524, %v587
        %v596 = vadd.f32 %v525, %v588
        %v597 = vadd.f32 %v526, %v589
        %v598 = vadd.f32 %v527, %v590
        %v599 = vadd.f32 %v528, %v591
        %v600 = vadd.f32 %v529, %v592
        %v601 = vadd.f32 %v530, %v593
        %v602 = vadd.f32 %v531, %v594
        %v603 = vld [vmem:[%s1 + $0x5] sm:$0x1]
        %s604 = sld [smem:[#allocation5 + $0x5]]
        %605 = vset.pattern.permute.xlu0 5
        %606 = vperm.xlu0 %605, %v232
        %v607 = vpop.permute.xlu0 %606
        %609 = vset.pattern.permute.xlu0 5
        %610 = vperm.xlu0 %609, %v233
        %v611 = vpop.permute.xlu0 %610
        %613 = vset.pattern.permute.xlu0 5
        %614 = vperm.xlu0 %613, %v234
        %v615 = vpop.permute.xlu0 %614
        %617 = vset.pattern.permute.xlu0 5
        %618 = vperm.xlu0 %617, %v235
        %v619 = vpop.permute.xlu0 %618
        %621 = vset.pattern.permute.xlu0 5
        %622 = vperm.xlu0 %621, %v236
        %v623 = vpop.permute.xlu0 %622
        %625 = vset.pattern.permute.xlu0 5
        %626 = vperm.xlu0 %625, %v237
        %v627 = vpop.permute.xlu0 %626
        %629 = vset.pattern.permute.xlu0 5
        %630 = vperm.xlu0 %629, %v238
        %v631 = vpop.permute.xlu0 %630
        %633 = vset.pattern.permute.xlu0 5
        %634 = vperm.xlu0 %633, %v239
        %v635 = vpop.permute.xlu0 %634
        %v637 = vlaneseq
        %v638 = vshrl.u32 %v637, 7
        %v639 = vsub.s32 0, %v638
        %v640 = vrot.slane %v603, %v639
        %v641 = vsub.f32 %v607, %v640
        %v642 = vsub.f32 %v611, %v640
        %v643 = vsub.f32 %v615, %v640
        %v644 = vsub.f32 %v619, %v640
        %v645 = vsub.f32 %v623, %v640
        %v646 = vsub.f32 %v627, %v640
        %v647 = vsub.f32 %v631, %v640
        %v648 = vsub.f32 %v635, %v640
        %v649 = vand.u32 2147483647, %v641
        %v650 = vand.u32 2147483647, %v642
        %v651 = vand.u32 2147483647, %v643
        %v652 = vand.u32 2147483647, %v644
        %v653 = vand.u32 2147483647, %v645
        %v654 = vand.u32 2147483647, %v646
        %v655 = vand.u32 2147483647, %v647
        %v656 = vand.u32 2147483647, %v648
        %v657 = vstv %s604
        %v658 = vmul.f32 %v657, %v649
        %v659 = vmul.f32 %v657, %v650
        %v660 = vmul.f32 %v657, %v651
        %v661 = vmul.f32 %v657, %v652
        %v662 = vmul.f32 %v657, %v653
        %v663 = vmul.f32 %v657, %v654
        %v664 = vmul.f32 %v657, %v655
        %v665 = vmul.f32 %v657, %v656
        %v666 = vadd.f32 %v595, %v658
        %v667 = vadd.f32 %v596, %v659
        %v668 = vadd.f32 %v597, %v660
        %v669 = vadd.f32 %v598, %v661
        %v670 = vadd.f32 %v599, %v662
        %v671 = vadd.f32 %v600, %v663
        %v672 = vadd.f32 %v601, %v664
        %v673 = vadd.f32 %v602, %v665
        %v674 = vld [vmem:[%s1 + $0x6] sm:$0x1]
        %s675 = sld [smem:[#allocation5 + $0x6]]
        %676 = vset.pattern.permute.xlu0 6
        %677 = vperm.xlu0 %676, %v232
        %v678 = vpop.permute.xlu0 %677
        %680 = vset.pattern.permute.xlu0 6
        %681 = vperm.xlu0 %680, %v233
        %v682 = vpop.permute.xlu0 %681
        %684 = vset.pattern.permute.xlu0 6
        %685 = vperm.xlu0 %684, %v234
        %v686 = vpop.permute.xlu0 %685
        %688 = vset.pattern.permute.xlu0 6
        %689 = vperm.xlu0 %688, %v235
        %v690 = vpop.permute.xlu0 %689
        %692 = vset.pattern.permute.xlu0 6
        %693 = vperm.xlu0 %692, %v236
        %v694 = vpop.permute.xlu0 %693
        %696 = vset.pattern.permute.xlu0 6
        %697 = vperm.xlu0 %696, %v237
        %v698 = vpop.permute.xlu0 %697
        %700 = vset.pattern.permute.xlu0 6
        %701 = vperm.xlu0 %700, %v238
        %v702 = vpop.permute.xlu0 %701
        %704 = vset.pattern.permute.xlu0 6
        %705 = vperm.xlu0 %704, %v239
        %v706 = vpop.permute.xlu0 %705
        %v708 = vlaneseq
        %v709 = vshrl.u32 %v708, 7
        %v710 = vsub.s32 0, %v709
        %v711 = vrot.slane %v674, %v710
        %v712 = vsub.f32 %v678, %v711
        %v713 = vsub.f32 %v682, %v711
        %v714 = vsub.f32 %v686, %v711
        %v715 = vsub.f32 %v690, %v711
        %v716 = vsub.f32 %v694, %v711
        %v717 = vsub.f32 %v698, %v711
        %v718 = vsub.f32 %v702, %v711
        %v719 = vsub.f32 %v706, %v711
        %v720 = vand.u32 2147483647, %v712
        %v721 = vand.u32 2147483647, %v713
        %v722 = vand.u32 2147483647, %v714
        %v723 = vand.u32 2147483647, %v715
        %v724 = vand.u32 2147483647, %v716
        %v725 = vand.u32 2147483647, %v717
        %v726 = vand.u32 2147483647, %v718
        %v727 = vand.u32 2147483647, %v719
        %v728 = vstv %s675
        %v729 = vmul.f32 %v728, %v720
        %v730 = vmul.f32 %v728, %v721
        %v731 = vmul.f32 %v728, %v722
        %v732 = vmul.f32 %v728, %v723
        %v733 = vmul.f32 %v728, %v724
        %v734 = vmul.f32 %v728, %v725
        %v735 = vmul.f32 %v728, %v726
        %v736 = vmul.f32 %v728, %v727
        %v737 = vadd.f32 %v666, %v729
        %v738 = vadd.f32 %v667, %v730
        %v739 = vadd.f32 %v668, %v731
        %v740 = vadd.f32 %v669, %v732
        %v741 = vadd.f32 %v670, %v733
        %v742 = vadd.f32 %v671, %v734
        %v743 = vadd.f32 %v672, %v735
        %v744 = vadd.f32 %v673, %v736
        %v745 = vld [vmem:[%s1 + $0x7] sm:$0x1]
        %s746 = sld [smem:[#allocation5 + $0x7]]
        %747 = vset.pattern.permute.xlu0 7
        %748 = vperm.xlu0 %747, %v232
        %v749 = vpop.permute.xlu0 %748
        %751 = vset.pattern.permute.xlu0 7
        %752 = vperm.xlu0 %751, %v233
        %v753 = vpop.permute.xlu0 %752
        %755 = vset.pattern.permute.xlu0 7
        %756 = vperm.xlu0 %755, %v234
        %v757 = vpop.permute.xlu0 %756
        %759 = vset.pattern.permute.xlu0 7
        %760 = vperm.xlu0 %759, %v235
        %v761 = vpop.permute.xlu0 %760
        %763 = vset.pattern.permute.xlu0 7
        %764 = vperm.xlu0 %763, %v236
        %v765 = vpop.permute.xlu0 %764
        %767 = vset.pattern.permute.xlu0 7
        %768 = vperm.xlu0 %767, %v237
        %v769 = vpop.permute.xlu0 %768
        %771 = vset.pattern.permute.xlu0 7
        %772 = vperm.xlu0 %771, %v238
        %v773 = vpop.permute.xlu0 %772
        %775 = vset.pattern.permute.xlu0 7
        %776 = vperm.xlu0 %775, %v239
        %v777 = vpop.permute.xlu0 %776
        %v779 = vlaneseq
        %v780 = vshrl.u32 %v779, 7
        %v781 = vsub.s32 0, %v780
        %v782 = vrot.slane %v745, %v781
        %v783 = vsub.f32 %v749, %v782
        %v784 = vsub.f32 %v753, %v782
        %v785 = vsub.f32 %v757, %v782
        %v786 = vsub.f32 %v761, %v782
        %v787 = vsub.f32 %v765, %v782
        %v788 = vsub.f32 %v769, %v782
        %v789 = vsub.f32 %v773, %v782
        %v790 = vsub.f32 %v777, %v782
        %v791 = vand.u32 2147483647, %v783
        %v792 = vand.u32 2147483647, %v784
        %v793 = vand.u32 2147483647, %v785
        %v794 = vand.u32 2147483647, %v786
        %v795 = vand.u32 2147483647, %v787
        %v796 = vand.u32 2147483647, %v788
        %v797 = vand.u32 2147483647, %v789
        %v798 = vand.u32 2147483647, %v790
        %v799 = vstv %s746
        %v800 = vmul.f32 %v799, %v791
        %v801 = vmul.f32 %v799, %v792
        %v802 = vmul.f32 %v799, %v793
        %v803 = vmul.f32 %v799, %v794
        %v804 = vmul.f32 %v799, %v795
        %v805 = vmul.f32 %v799, %v796
        %v806 = vmul.f32 %v799, %v797
        %v807 = vmul.f32 %v799, %v798
        %v808 = vadd.f32 %v737, %v800
        %v809 = vadd.f32 %v738, %v801
        %v810 = vadd.f32 %v739, %v802
        %v811 = vadd.f32 %v740, %v803
        %v812 = vadd.f32 %v741, %v804
        %v813 = vadd.f32 %v742, %v805
        %v814 = vadd.f32 %v743, %v806
        %v815 = vadd.f32 %v744, %v807
        %v816 = vld [vmem:[%s1 + $0x8] sm:$0x1]
        %s817 = sld [smem:[#allocation5 + $0x8]]
        %818 = vset.pattern.permute.xlu0 8
        %819 = vperm.xlu0 %818, %v232
        %v820 = vpop.permute.xlu0 %819
        %822 = vset.pattern.permute.xlu0 8
        %823 = vperm.xlu0 %822, %v233
        %v824 = vpop.permute.xlu0 %823
        %826 = vset.pattern.permute.xlu0 8
        %827 = vperm.xlu0 %826, %v234
        %v828 = vpop.permute.xlu0 %827
        %830 = vset.pattern.permute.xlu0 8
        %831 = vperm.xlu0 %830, %v235
        %v832 = vpop.permute.xlu0 %831
        %834 = vset.pattern.permute.xlu0 8
        %835 = vperm.xlu0 %834, %v236
        %v836 = vpop.permute.xlu0 %835
        %838 = vset.pattern.permute.xlu0 8
        %839 = vperm.xlu0 %838, %v237
        %v840 = vpop.permute.xlu0 %839
        %842 = vset.pattern.permute.xlu0 8
        %843 = vperm.xlu0 %842, %v238
        %v844 = vpop.permute.xlu0 %843
        %846 = vset.pattern.permute.xlu0 8
        %847 = vperm.xlu0 %846, %v239
        %v848 = vpop.permute.xlu0 %847
        %v850 = vlaneseq
        %v851 = vshrl.u32 %v850, 7
        %v852 = vsub.s32 0, %v851
        %v853 = vrot.slane %v816, %v852
        %v854 = vsub.f32 %v820, %v853
        %v855 = vsub.f32 %v824, %v853
        %v856 = vsub.f32 %v828, %v853
        %v857 = vsub.f32 %v832, %v853
        %v858 = vsub.f32 %v836, %v853
        %v859 = vsub.f32 %v840, %v853
        %v860 = vsub.f32 %v844, %v853
        %v861 = vsub.f32 %v848, %v853
        %v862 = vand.u32 2147483647, %v854
        %v863 = vand.u32 2147483647, %v855
        %v864 = vand.u32 2147483647, %v856
        %v865 = vand.u32 2147483647, %v857
        %v866 = vand.u32 2147483647, %v858
        %v867 = vand.u32 2147483647, %v859
        %v868 = vand.u32 2147483647, %v860
        %v869 = vand.u32 2147483647, %v861
        %v870 = vstv %s817
        %v871 = vmul.f32 %v870, %v862
        %v872 = vmul.f32 %v870, %v863
        %v873 = vmul.f32 %v870, %v864
        %v874 = vmul.f32 %v870, %v865
        %v875 = vmul.f32 %v870, %v866
        %v876 = vmul.f32 %v870, %v867
        %v877 = vmul.f32 %v870, %v868
        %v878 = vmul.f32 %v870, %v869
        %v879 = vadd.f32 %v808, %v871
        %v880 = vadd.f32 %v809, %v872
        %v881 = vadd.f32 %v810, %v873
        %v882 = vadd.f32 %v811, %v874
        %v883 = vadd.f32 %v812, %v875
        %v884 = vadd.f32 %v813, %v876
        %v885 = vadd.f32 %v814, %v877
        %v886 = vadd.f32 %v815, %v878
        %v887 = vld [vmem:[%s1 + $0x9] sm:$0x1]
        %s888 = sld [smem:[#allocation5 + $0x9]]
        %889 = vset.pattern.permute.xlu0 9
        %890 = vperm.xlu0 %889, %v232
        %v891 = vpop.permute.xlu0 %890
        %893 = vset.pattern.permute.xlu0 9
        %894 = vperm.xlu0 %893, %v233
        %v895 = vpop.permute.xlu0 %894
        %897 = vset.pattern.permute.xlu0 9
        %898 = vperm.xlu0 %897, %v234
        %v899 = vpop.permute.xlu0 %898
        %901 = vset.pattern.permute.xlu0 9
        %902 = vperm.xlu0 %901, %v235
        %v903 = vpop.permute.xlu0 %902
        %905 = vset.pattern.permute.xlu0 9
        %906 = vperm.xlu0 %905, %v236
        %v907 = vpop.permute.xlu0 %906
        %909 = vset.pattern.permute.xlu0 9
        %910 = vperm.xlu0 %909, %v237
        %v911 = vpop.permute.xlu0 %910
        %913 = vset.pattern.permute.xlu0 9
        %914 = vperm.xlu0 %913, %v238
        %v915 = vpop.permute.xlu0 %914
        %917 = vset.pattern.permute.xlu0 9
        %918 = vperm.xlu0 %917, %v239
        %v919 = vpop.permute.xlu0 %918
        %v921 = vlaneseq
        %v922 = vshrl.u32 %v921, 7
        %v923 = vsub.s32 0, %v922
        %v924 = vrot.slane %v887, %v923
        %v925 = vsub.f32 %v891, %v924
        %v926 = vsub.f32 %v895, %v924
        %v927 = vsub.f32 %v899, %v924
        %v928 = vsub.f32 %v903, %v924
        %v929 = vsub.f32 %v907, %v924
        %v930 = vsub.f32 %v911, %v924
        %v931 = vsub.f32 %v915, %v924
        %v932 = vsub.f32 %v919, %v924
        %v933 = vand.u32 2147483647, %v925
        %v934 = vand.u32 2147483647, %v926
        %v935 = vand.u32 2147483647, %v927
        %v936 = vand.u32 2147483647, %v928
        %v937 = vand.u32 2147483647, %v929
        %v938 = vand.u32 2147483647, %v930
        %v939 = vand.u32 2147483647, %v931
        %v940 = vand.u32 2147483647, %v932
        %v941 = vstv %s888
        %v942 = vmul.f32 %v941, %v933
        %v943 = vmul.f32 %v941, %v934
        %v944 = vmul.f32 %v941, %v935
        %v945 = vmul.f32 %v941, %v936
        %v946 = vmul.f32 %v941, %v937
        %v947 = vmul.f32 %v941, %v938
        %v948 = vmul.f32 %v941, %v939
        %v949 = vmul.f32 %v941, %v940
        %v950 = vadd.f32 %v879, %v942
        %v951 = vadd.f32 %v880, %v943
        %v952 = vadd.f32 %v881, %v944
        %v953 = vadd.f32 %v882, %v945
        %v954 = vadd.f32 %v883, %v946
        %v955 = vadd.f32 %v884, %v947
        %v956 = vadd.f32 %v885, %v948
        %v957 = vadd.f32 %v886, %v949
        %v958 = vld [vmem:[%s1 + $0xa] sm:$0x1]
        %s959 = sld [smem:[#allocation5 + $0xa]]
        %960 = vset.pattern.permute.xlu0 10
        %961 = vperm.xlu0 %960, %v232
        %v962 = vpop.permute.xlu0 %961
        %964 = vset.pattern.permute.xlu0 10
        %965 = vperm.xlu0 %964, %v233
        %v966 = vpop.permute.xlu0 %965
        %968 = vset.pattern.permute.xlu0 10
        %969 = vperm.xlu0 %968, %v234
        %v970 = vpop.permute.xlu0 %969
        %972 = vset.pattern.permute.xlu0 10
        %973 = vperm.xlu0 %972, %v235
        %v974 = vpop.permute.xlu0 %973
        %976 = vset.pattern.permute.xlu0 10
        %977 = vperm.xlu0 %976, %v236
        %v978 = vpop.permute.xlu0 %977
        %980 = vset.pattern.permute.xlu0 10
        %981 = vperm.xlu0 %980, %v237
        %v982 = vpop.permute.xlu0 %981
        %984 = vset.pattern.permute.xlu0 10
        %985 = vperm.xlu0 %984, %v238
        %v986 = vpop.permute.xlu0 %985
        %988 = vset.pattern.permute.xlu0 10
        %989 = vperm.xlu0 %988, %v239
        %v990 = vpop.permute.xlu0 %989
        %v992 = vlaneseq
        %v993 = vshrl.u32 %v992, 7
        %v994 = vsub.s32 0, %v993
        %v995 = vrot.slane %v958, %v994
        %v996 = vsub.f32 %v962, %v995
        %v997 = vsub.f32 %v966, %v995
        %v998 = vsub.f32 %v970, %v995
        %v999 = vsub.f32 %v974, %v995
        %v1000 = vsub.f32 %v978, %v995
        %v1001 = vsub.f32 %v982, %v995
        %v1002 = vsub.f32 %v986, %v995
        %v1003 = vsub.f32 %v990, %v995
        %v1004 = vand.u32 2147483647, %v996
        %v1005 = vand.u32 2147483647, %v997
        %v1006 = vand.u32 2147483647, %v998
        %v1007 = vand.u32 2147483647, %v999
        %v1008 = vand.u32 2147483647, %v1000
        %v1009 = vand.u32 2147483647, %v1001
        %v1010 = vand.u32 2147483647, %v1002
        %v1011 = vand.u32 2147483647, %v1003
        %v1012 = vstv %s959
        %v1013 = vmul.f32 %v1012, %v1004
        %v1014 = vmul.f32 %v1012, %v1005
        %v1015 = vmul.f32 %v1012, %v1006
        %v1016 = vmul.f32 %v1012, %v1007
        %v1017 = vmul.f32 %v1012, %v1008
        %v1018 = vmul.f32 %v1012, %v1009
        %v1019 = vmul.f32 %v1012, %v1010
        %v1020 = vmul.f32 %v1012, %v1011
        %v1021 = vadd.f32 %v950, %v1013
        %v1022 = vadd.f32 %v951, %v1014
        %v1023 = vadd.f32 %v952, %v1015
        %v1024 = vadd.f32 %v953, %v1016
        %v1025 = vadd.f32 %v954, %v1017
        %v1026 = vadd.f32 %v955, %v1018
        %v1027 = vadd.f32 %v956, %v1019
        %v1028 = vadd.f32 %v957, %v1020
        %v1029 = vld [vmem:[%s1 + $0xb] sm:$0x1]
        %s1030 = sld [smem:[#allocation5 + $0xb]]
        %1031 = vset.pattern.permute.xlu0 11
        %1032 = vperm.xlu0 %1031, %v232
        %v1033 = vpop.permute.xlu0 %1032
        %1035 = vset.pattern.permute.xlu0 11
        %1036 = vperm.xlu0 %1035, %v233
        %v1037 = vpop.permute.xlu0 %1036
        %1039 = vset.pattern.permute.xlu0 11
        %1040 = vperm.xlu0 %1039, %v234
        %v1041 = vpop.permute.xlu0 %1040
        %1043 = vset.pattern.permute.xlu0 11
        %1044 = vperm.xlu0 %1043, %v235
        %v1045 = vpop.permute.xlu0 %1044
        %1047 = vset.pattern.permute.xlu0 11
        %1048 = vperm.xlu0 %1047, %v236
        %v1049 = vpop.permute.xlu0 %1048
        %1051 = vset.pattern.permute.xlu0 11
        %1052 = vperm.xlu0 %1051, %v237
        %v1053 = vpop.permute.xlu0 %1052
        %1055 = vset.pattern.permute.xlu0 11
        %1056 = vperm.xlu0 %1055, %v238
        %v1057 = vpop.permute.xlu0 %1056
        %1059 = vset.pattern.permute.xlu0 11
        %1060 = vperm.xlu0 %1059, %v239
        %v1061 = vpop.permute.xlu0 %1060
        %v1063 = vlaneseq
        %v1064 = vshrl.u32 %v1063, 7
        %v1065 = vsub.s32 0, %v1064
        %v1066 = vrot.slane %v1029, %v1065
        %v1067 = vsub.f32 %v1033, %v1066
        %v1068 = vsub.f32 %v1037, %v1066
        %v1069 = vsub.f32 %v1041, %v1066
        %v1070 = vsub.f32 %v1045, %v1066
        %v1071 = vsub.f32 %v1049, %v1066
        %v1072 = vsub.f32 %v1053, %v1066
        %v1073 = vsub.f32 %v1057, %v1066
        %v1074 = vsub.f32 %v1061, %v1066
        %v1075 = vand.u32 2147483647, %v1067
        %v1076 = vand.u32 2147483647, %v1068
        %v1077 = vand.u32 2147483647, %v1069
        %v1078 = vand.u32 2147483647, %v1070
        %v1079 = vand.u32 2147483647, %v1071
        %v1080 = vand.u32 2147483647, %v1072
        %v1081 = vand.u32 2147483647, %v1073
        %v1082 = vand.u32 2147483647, %v1074
        %v1083 = vstv %s1030
        %v1084 = vmul.f32 %v1083, %v1075
        %v1085 = vmul.f32 %v1083, %v1076
        %v1086 = vmul.f32 %v1083, %v1077
        %v1087 = vmul.f32 %v1083, %v1078
        %v1088 = vmul.f32 %v1083, %v1079
        %v1089 = vmul.f32 %v1083, %v1080
        %v1090 = vmul.f32 %v1083, %v1081
        %v1091 = vmul.f32 %v1083, %v1082
        %v1092 = vadd.f32 %v1021, %v1084
        %v1093 = vadd.f32 %v1022, %v1085
        %v1094 = vadd.f32 %v1023, %v1086
        %v1095 = vadd.f32 %v1024, %v1087
        %v1096 = vadd.f32 %v1025, %v1088
        %v1097 = vadd.f32 %v1026, %v1089
        %v1098 = vadd.f32 %v1027, %v1090
        %v1099 = vadd.f32 %v1028, %v1091
        %v1100 = vld [vmem:[%s1 + $0xc] sm:$0x1]
        %s1101 = sld [smem:[#allocation5 + $0xc]]
        %1102 = vset.pattern.permute.xlu0 12
        %1103 = vperm.xlu0 %1102, %v232
        %v1104 = vpop.permute.xlu0 %1103
        %1106 = vset.pattern.permute.xlu0 12
        %1107 = vperm.xlu0 %1106, %v233
        %v1108 = vpop.permute.xlu0 %1107
        %1110 = vset.pattern.permute.xlu0 12
        %1111 = vperm.xlu0 %1110, %v234
        %v1112 = vpop.permute.xlu0 %1111
        %1114 = vset.pattern.permute.xlu0 12
        %1115 = vperm.xlu0 %1114, %v235
        %v1116 = vpop.permute.xlu0 %1115
        %1118 = vset.pattern.permute.xlu0 12
        %1119 = vperm.xlu0 %1118, %v236
        %v1120 = vpop.permute.xlu0 %1119
        %1122 = vset.pattern.permute.xlu0 12
        %1123 = vperm.xlu0 %1122, %v237
        %v1124 = vpop.permute.xlu0 %1123
        %1126 = vset.pattern.permute.xlu0 12
        %1127 = vperm.xlu0 %1126, %v238
        %v1128 = vpop.permute.xlu0 %1127
        %1130 = vset.pattern.permute.xlu0 12
        %1131 = vperm.xlu0 %1130, %v239
        %v1132 = vpop.permute.xlu0 %1131
        %v1134 = vlaneseq
        %v1135 = vshrl.u32 %v1134, 7
        %v1136 = vsub.s32 0, %v1135
        %v1137 = vrot.slane %v1100, %v1136
        %v1138 = vsub.f32 %v1104, %v1137
        %v1139 = vsub.f32 %v1108, %v1137
        %v1140 = vsub.f32 %v1112, %v1137
        %v1141 = vsub.f32 %v1116, %v1137
        %v1142 = vsub.f32 %v1120, %v1137
        %v1143 = vsub.f32 %v1124, %v1137
        %v1144 = vsub.f32 %v1128, %v1137
        %v1145 = vsub.f32 %v1132, %v1137
        %v1146 = vand.u32 2147483647, %v1138
        %v1147 = vand.u32 2147483647, %v1139
        %v1148 = vand.u32 2147483647, %v1140
        %v1149 = vand.u32 2147483647, %v1141
        %v1150 = vand.u32 2147483647, %v1142
        %v1151 = vand.u32 2147483647, %v1143
        %v1152 = vand.u32 2147483647, %v1144
        %v1153 = vand.u32 2147483647, %v1145
        %v1154 = vstv %s1101
        %v1155 = vmul.f32 %v1154, %v1146
        %v1156 = vmul.f32 %v1154, %v1147
        %v1157 = vmul.f32 %v1154, %v1148
        %v1158 = vmul.f32 %v1154, %v1149
        %v1159 = vmul.f32 %v1154, %v1150
        %v1160 = vmul.f32 %v1154, %v1151
        %v1161 = vmul.f32 %v1154, %v1152
        %v1162 = vmul.f32 %v1154, %v1153
        %v1163 = vadd.f32 %v1092, %v1155
        %v1164 = vadd.f32 %v1093, %v1156
        %v1165 = vadd.f32 %v1094, %v1157
        %v1166 = vadd.f32 %v1095, %v1158
        %v1167 = vadd.f32 %v1096, %v1159
        %v1168 = vadd.f32 %v1097, %v1160
        %v1169 = vadd.f32 %v1098, %v1161
        %v1170 = vadd.f32 %v1099, %v1162
        %v1171 = vld [vmem:[%s1 + $0xd] sm:$0x1]
        %s1172 = sld [smem:[#allocation5 + $0xd]]
        %1173 = vset.pattern.permute.xlu0 13
        %1174 = vperm.xlu0 %1173, %v232
        %v1175 = vpop.permute.xlu0 %1174
        %1177 = vset.pattern.permute.xlu0 13
        %1178 = vperm.xlu0 %1177, %v233
        %v1179 = vpop.permute.xlu0 %1178
        %1181 = vset.pattern.permute.xlu0 13
        %1182 = vperm.xlu0 %1181, %v234
        %v1183 = vpop.permute.xlu0 %1182
        %1185 = vset.pattern.permute.xlu0 13
        %1186 = vperm.xlu0 %1185, %v235
        %v1187 = vpop.permute.xlu0 %1186
        %1189 = vset.pattern.permute.xlu0 13
        %1190 = vperm.xlu0 %1189, %v236
        %v1191 = vpop.permute.xlu0 %1190
        %1193 = vset.pattern.permute.xlu0 13
        %1194 = vperm.xlu0 %1193, %v237
        %v1195 = vpop.permute.xlu0 %1194
        %1197 = vset.pattern.permute.xlu0 13
        %1198 = vperm.xlu0 %1197, %v238
        %v1199 = vpop.permute.xlu0 %1198
        %1201 = vset.pattern.permute.xlu0 13
        %1202 = vperm.xlu0 %1201, %v239
        %v1203 = vpop.permute.xlu0 %1202
        %v1205 = vlaneseq
        %v1206 = vshrl.u32 %v1205, 7
        %v1207 = vsub.s32 0, %v1206
        %v1208 = vrot.slane %v1171, %v1207
        %v1209 = vsub.f32 %v1175, %v1208
        %v1210 = vsub.f32 %v1179, %v1208
        %v1211 = vsub.f32 %v1183, %v1208
        %v1212 = vsub.f32 %v1187, %v1208
        %v1213 = vsub.f32 %v1191, %v1208
        %v1214 = vsub.f32 %v1195, %v1208
        %v1215 = vsub.f32 %v1199, %v1208
        %v1216 = vsub.f32 %v1203, %v1208
        %v1217 = vand.u32 2147483647, %v1209
        %v1218 = vand.u32 2147483647, %v1210
        %v1219 = vand.u32 2147483647, %v1211
        %v1220 = vand.u32 2147483647, %v1212
        %v1221 = vand.u32 2147483647, %v1213
        %v1222 = vand.u32 2147483647, %v1214
        %v1223 = vand.u32 2147483647, %v1215
        %v1224 = vand.u32 2147483647, %v1216
        %v1225 = vstv %s1172
        %v1226 = vmul.f32 %v1225, %v1217
        %v1227 = vmul.f32 %v1225, %v1218
        %v1228 = vmul.f32 %v1225, %v1219
        %v1229 = vmul.f32 %v1225, %v1220
        %v1230 = vmul.f32 %v1225, %v1221
        %v1231 = vmul.f32 %v1225, %v1222
        %v1232 = vmul.f32 %v1225, %v1223
        %v1233 = vmul.f32 %v1225, %v1224
        %v1234 = vadd.f32 %v1163, %v1226
        %v1235 = vadd.f32 %v1164, %v1227
        %v1236 = vadd.f32 %v1165, %v1228
        %v1237 = vadd.f32 %v1166, %v1229
        %v1238 = vadd.f32 %v1167, %v1230
        %v1239 = vadd.f32 %v1168, %v1231
        %v1240 = vadd.f32 %v1169, %v1232
        %v1241 = vadd.f32 %v1170, %v1233
        %v1242 = vld [vmem:[%s1 + $0xe] sm:$0x1]
        %s1243 = sld [smem:[#allocation5 + $0xe]]
        %1244 = vset.pattern.permute.xlu0 14
        %1245 = vperm.xlu0 %1244, %v232
        %v1246 = vpop.permute.xlu0 %1245
        %1248 = vset.pattern.permute.xlu0 14
        %1249 = vperm.xlu0 %1248, %v233
        %v1250 = vpop.permute.xlu0 %1249
        %1252 = vset.pattern.permute.xlu0 14
        %1253 = vperm.xlu0 %1252, %v234
        %v1254 = vpop.permute.xlu0 %1253
        %1256 = vset.pattern.permute.xlu0 14
        %1257 = vperm.xlu0 %1256, %v235
        %v1258 = vpop.permute.xlu0 %1257
        %1260 = vset.pattern.permute.xlu0 14
        %1261 = vperm.xlu0 %1260, %v236
        %v1262 = vpop.permute.xlu0 %1261
        %1264 = vset.pattern.permute.xlu0 14
        %1265 = vperm.xlu0 %1264, %v237
        %v1266 = vpop.permute.xlu0 %1265
        %1268 = vset.pattern.permute.xlu0 14
        %1269 = vperm.xlu0 %1268, %v238
        %v1270 = vpop.permute.xlu0 %1269
        %1272 = vset.pattern.permute.xlu0 14
        %1273 = vperm.xlu0 %1272, %v239
        %v1274 = vpop.permute.xlu0 %1273
        %v1276 = vlaneseq
        %v1277 = vshrl.u32 %v1276, 7
        %v1278 = vsub.s32 0, %v1277
        %v1279 = vrot.slane %v1242, %v1278
        %v1280 = vsub.f32 %v1246, %v1279
        %v1281 = vsub.f32 %v1250, %v1279
        %v1282 = vsub.f32 %v1254, %v1279
        %v1283 = vsub.f32 %v1258, %v1279
        %v1284 = vsub.f32 %v1262, %v1279
        %v1285 = vsub.f32 %v1266, %v1279
        %v1286 = vsub.f32 %v1270, %v1279
        %v1287 = vsub.f32 %v1274, %v1279
        %v1288 = vand.u32 2147483647, %v1280
        %v1289 = vand.u32 2147483647, %v1281
        %v1290 = vand.u32 2147483647, %v1282
        %v1291 = vand.u32 2147483647, %v1283
        %v1292 = vand.u32 2147483647, %v1284
        %v1293 = vand.u32 2147483647, %v1285
        %v1294 = vand.u32 2147483647, %v1286
        %v1295 = vand.u32 2147483647, %v1287
        %v1296 = vstv %s1243
        %v1297 = vmul.f32 %v1296, %v1288
        %v1298 = vmul.f32 %v1296, %v1289
        %v1299 = vmul.f32 %v1296, %v1290
        %v1300 = vmul.f32 %v1296, %v1291
        %v1301 = vmul.f32 %v1296, %v1292
        %v1302 = vmul.f32 %v1296, %v1293
        %v1303 = vmul.f32 %v1296, %v1294
        %v1304 = vmul.f32 %v1296, %v1295
        %v1305 = vadd.f32 %v1234, %v1297
        %v1306 = vadd.f32 %v1235, %v1298
        %v1307 = vadd.f32 %v1236, %v1299
        %v1308 = vadd.f32 %v1237, %v1300
        %v1309 = vadd.f32 %v1238, %v1301
        %v1310 = vadd.f32 %v1239, %v1302
        %v1311 = vadd.f32 %v1240, %v1303
        %v1312 = vadd.f32 %v1241, %v1304
        %v1313 = vld [vmem:[%s1 + $0xf] sm:$0x1]
        %s1314 = sld [smem:[#allocation5 + $0xf]]
        %1315 = vset.pattern.permute.xlu0 15
        %1316 = vperm.xlu0 %1315, %v232
        %v1317 = vpop.permute.xlu0 %1316
        %1319 = vset.pattern.permute.xlu0 15
        %1320 = vperm.xlu0 %1319, %v233
        %v1321 = vpop.permute.xlu0 %1320
        %1323 = vset.pattern.permute.xlu0 15
        %1324 = vperm.xlu0 %1323, %v234
        %v1325 = vpop.permute.xlu0 %1324
        %1327 = vset.pattern.permute.xlu0 15
        %1328 = vperm.xlu0 %1327, %v235
        %v1329 = vpop.permute.xlu0 %1328
        %1331 = vset.pattern.permute.xlu0 15
        %1332 = vperm.xlu0 %1331, %v236
        %v1333 = vpop.permute.xlu0 %1332
        %1335 = vset.pattern.permute.xlu0 15
        %1336 = vperm.xlu0 %1335, %v237
        %v1337 = vpop.permute.xlu0 %1336
        %1339 = vset.pattern.permute.xlu0 15
        %1340 = vperm.xlu0 %1339, %v238
        %v1341 = vpop.permute.xlu0 %1340
        %1343 = vset.pattern.permute.xlu0 15
        %1344 = vperm.xlu0 %1343, %v239
        %v1345 = vpop.permute.xlu0 %1344
        %v1347 = vlaneseq
        %v1348 = vshrl.u32 %v1347, 7
        %v1349 = vsub.s32 0, %v1348
        %v1350 = vrot.slane %v1313, %v1349
        %v1351 = vsub.f32 %v1317, %v1350
        %v1352 = vsub.f32 %v1321, %v1350
        %v1353 = vsub.f32 %v1325, %v1350
        %v1354 = vsub.f32 %v1329, %v1350
        %v1355 = vsub.f32 %v1333, %v1350
        %v1356 = vsub.f32 %v1337, %v1350
        %v1357 = vsub.f32 %v1341, %v1350
        %v1358 = vsub.f32 %v1345, %v1350
        %v1359 = vand.u32 2147483647, %v1351
        %v1360 = vand.u32 2147483647, %v1352
        %v1361 = vand.u32 2147483647, %v1353
        %v1362 = vand.u32 2147483647, %v1354
        %v1363 = vand.u32 2147483647, %v1355
        %v1364 = vand.u32 2147483647, %v1356
        %v1365 = vand.u32 2147483647, %v1357
        %v1366 = vand.u32 2147483647, %v1358
        %v1367 = vstv %s1314
        %v1368 = vmul.f32 %v1367, %v1359
        %v1369 = vmul.f32 %v1367, %v1360
        %v1370 = vmul.f32 %v1367, %v1361
        %v1371 = vmul.f32 %v1367, %v1362
        %v1372 = vmul.f32 %v1367, %v1363
        %v1373 = vmul.f32 %v1367, %v1364
        %v1374 = vmul.f32 %v1367, %v1365
        %v1375 = vmul.f32 %v1367, %v1366
        %v1376 = vadd.f32 %v1305, %v1368
        %v1377 = vadd.f32 %v1306, %v1369
        %v1378 = vadd.f32 %v1307, %v1370
        %v1379 = vadd.f32 %v1308, %v1371
        %v1380 = vadd.f32 %v1309, %v1372
        %v1381 = vadd.f32 %v1310, %v1373
        %v1382 = vadd.f32 %v1311, %v1374
        %v1383 = vadd.f32 %v1312, %v1375
        %v1384 = vld [vmem:[%s1 + $0x10] sm:$0x1]
        %s1385 = sld [smem:[#allocation5 + $0x10]]
        %1386 = vset.pattern.permute.xlu0 16
        %1387 = vperm.xlu0 %1386, %v232
        %v1388 = vpop.permute.xlu0 %1387
        %1390 = vset.pattern.permute.xlu0 16
        %1391 = vperm.xlu0 %1390, %v233
        %v1392 = vpop.permute.xlu0 %1391
        %1394 = vset.pattern.permute.xlu0 16
        %1395 = vperm.xlu0 %1394, %v234
        %v1396 = vpop.permute.xlu0 %1395
        %1398 = vset.pattern.permute.xlu0 16
        %1399 = vperm.xlu0 %1398, %v235
        %v1400 = vpop.permute.xlu0 %1399
        %1402 = vset.pattern.permute.xlu0 16
        %1403 = vperm.xlu0 %1402, %v236
        %v1404 = vpop.permute.xlu0 %1403
        %1406 = vset.pattern.permute.xlu0 16
        %1407 = vperm.xlu0 %1406, %v237
        %v1408 = vpop.permute.xlu0 %1407
        %1410 = vset.pattern.permute.xlu0 16
        %1411 = vperm.xlu0 %1410, %v238
        %v1412 = vpop.permute.xlu0 %1411
        %1414 = vset.pattern.permute.xlu0 16
        %1415 = vperm.xlu0 %1414, %v239
        %v1416 = vpop.permute.xlu0 %1415
        %v1418 = vlaneseq
        %v1419 = vshrl.u32 %v1418, 7
        %v1420 = vsub.s32 0, %v1419
        %v1421 = vrot.slane %v1384, %v1420
        %v1422 = vsub.f32 %v1388, %v1421
        %v1423 = vsub.f32 %v1392, %v1421
        %v1424 = vsub.f32 %v1396, %v1421
        %v1425 = vsub.f32 %v1400, %v1421
        %v1426 = vsub.f32 %v1404, %v1421
        %v1427 = vsub.f32 %v1408, %v1421
        %v1428 = vsub.f32 %v1412, %v1421
        %v1429 = vsub.f32 %v1416, %v1421
        %v1430 = vand.u32 2147483647, %v1422
        %v1431 = vand.u32 2147483647, %v1423
        %v1432 = vand.u32 2147483647, %v1424
        %v1433 = vand.u32 2147483647, %v1425
        %v1434 = vand.u32 2147483647, %v1426
        %v1435 = vand.u32 2147483647, %v1427
        %v1436 = vand.u32 2147483647, %v1428
        %v1437 = vand.u32 2147483647, %v1429
        %v1438 = vstv %s1385
        %v1439 = vmul.f32 %v1438, %v1430
        %v1440 = vmul.f32 %v1438, %v1431
        %v1441 = vmul.f32 %v1438, %v1432
        %v1442 = vmul.f32 %v1438, %v1433
        %v1443 = vmul.f32 %v1438, %v1434
        %v1444 = vmul.f32 %v1438, %v1435
        %v1445 = vmul.f32 %v1438, %v1436
        %v1446 = vmul.f32 %v1438, %v1437
        %v1447 = vadd.f32 %v1376, %v1439
        %v1448 = vadd.f32 %v1377, %v1440
        %v1449 = vadd.f32 %v1378, %v1441
        %v1450 = vadd.f32 %v1379, %v1442
        %v1451 = vadd.f32 %v1380, %v1443
        %v1452 = vadd.f32 %v1381, %v1444
        %v1453 = vadd.f32 %v1382, %v1445
        %v1454 = vadd.f32 %v1383, %v1446
        %v1455 = vld [vmem:[%s1 + $0x11] sm:$0x1]
        %s1456 = sld [smem:[#allocation5 + $0x11]]
        %1457 = vset.pattern.permute.xlu0 17
        %1458 = vperm.xlu0 %1457, %v232
        %v1459 = vpop.permute.xlu0 %1458
        %1461 = vset.pattern.permute.xlu0 17
        %1462 = vperm.xlu0 %1461, %v233
        %v1463 = vpop.permute.xlu0 %1462
        %1465 = vset.pattern.permute.xlu0 17
        %1466 = vperm.xlu0 %1465, %v234
        %v1467 = vpop.permute.xlu0 %1466
        %1469 = vset.pattern.permute.xlu0 17
        %1470 = vperm.xlu0 %1469, %v235
        %v1471 = vpop.permute.xlu0 %1470
        %1473 = vset.pattern.permute.xlu0 17
        %1474 = vperm.xlu0 %1473, %v236
        %v1475 = vpop.permute.xlu0 %1474
        %1477 = vset.pattern.permute.xlu0 17
        %1478 = vperm.xlu0 %1477, %v237
        %v1479 = vpop.permute.xlu0 %1478
        %1481 = vset.pattern.permute.xlu0 17
        %1482 = vperm.xlu0 %1481, %v238
        %v1483 = vpop.permute.xlu0 %1482
        %1485 = vset.pattern.permute.xlu0 17
        %1486 = vperm.xlu0 %1485, %v239
        %v1487 = vpop.permute.xlu0 %1486
        %v1489 = vlaneseq
        %v1490 = vshrl.u32 %v1489, 7
        %v1491 = vsub.s32 0, %v1490
        %v1492 = vrot.slane %v1455, %v1491
        %v1493 = vsub.f32 %v1459, %v1492
        %v1494 = vsub.f32 %v1463, %v1492
        %v1495 = vsub.f32 %v1467, %v1492
        %v1496 = vsub.f32 %v1471, %v1492
        %v1497 = vsub.f32 %v1475, %v1492
        %v1498 = vsub.f32 %v1479, %v1492
        %v1499 = vsub.f32 %v1483, %v1492
        %v1500 = vsub.f32 %v1487, %v1492
        %v1501 = vand.u32 2147483647, %v1493
        %v1502 = vand.u32 2147483647, %v1494
        %v1503 = vand.u32 2147483647, %v1495
        %v1504 = vand.u32 2147483647, %v1496
        %v1505 = vand.u32 2147483647, %v1497
        %v1506 = vand.u32 2147483647, %v1498
        %v1507 = vand.u32 2147483647, %v1499
        %v1508 = vand.u32 2147483647, %v1500
        %v1509 = vstv %s1456
        %v1510 = vmul.f32 %v1509, %v1501
        %v1511 = vmul.f32 %v1509, %v1502
        %v1512 = vmul.f32 %v1509, %v1503
        %v1513 = vmul.f32 %v1509, %v1504
        %v1514 = vmul.f32 %v1509, %v1505
        %v1515 = vmul.f32 %v1509, %v1506
        %v1516 = vmul.f32 %v1509, %v1507
        %v1517 = vmul.f32 %v1509, %v1508
        %v1518 = vadd.f32 %v1447, %v1510
        %v1519 = vadd.f32 %v1448, %v1511
        %v1520 = vadd.f32 %v1449, %v1512
        %v1521 = vadd.f32 %v1450, %v1513
        %v1522 = vadd.f32 %v1451, %v1514
        %v1523 = vadd.f32 %v1452, %v1515
        %v1524 = vadd.f32 %v1453, %v1516
        %v1525 = vadd.f32 %v1454, %v1517
        %v1526 = vld [vmem:[%s1 + $0x12] sm:$0x1]
        %s1527 = sld [smem:[#allocation5 + $0x12]]
        %1528 = vset.pattern.permute.xlu0 18
        %1529 = vperm.xlu0 %1528, %v232
        %v1530 = vpop.permute.xlu0 %1529
        %1532 = vset.pattern.permute.xlu0 18
        %1533 = vperm.xlu0 %1532, %v233
        %v1534 = vpop.permute.xlu0 %1533
        %1536 = vset.pattern.permute.xlu0 18
        %1537 = vperm.xlu0 %1536, %v234
        %v1538 = vpop.permute.xlu0 %1537
        %1540 = vset.pattern.permute.xlu0 18
        %1541 = vperm.xlu0 %1540, %v235
        %v1542 = vpop.permute.xlu0 %1541
        %1544 = vset.pattern.permute.xlu0 18
        %1545 = vperm.xlu0 %1544, %v236
        %v1546 = vpop.permute.xlu0 %1545
        %1548 = vset.pattern.permute.xlu0 18
        %1549 = vperm.xlu0 %1548, %v237
        %v1550 = vpop.permute.xlu0 %1549
        %1552 = vset.pattern.permute.xlu0 18
        %1553 = vperm.xlu0 %1552, %v238
        %v1554 = vpop.permute.xlu0 %1553
        %1556 = vset.pattern.permute.xlu0 18
        %1557 = vperm.xlu0 %1556, %v239
        %v1558 = vpop.permute.xlu0 %1557
        %v1560 = vlaneseq
        %v1561 = vshrl.u32 %v1560, 7
        %v1562 = vsub.s32 0, %v1561
        %v1563 = vrot.slane %v1526, %v1562
        %v1564 = vsub.f32 %v1530, %v1563
        %v1565 = vsub.f32 %v1534, %v1563
        %v1566 = vsub.f32 %v1538, %v1563
        %v1567 = vsub.f32 %v1542, %v1563
        %v1568 = vsub.f32 %v1546, %v1563
        %v1569 = vsub.f32 %v1550, %v1563
        %v1570 = vsub.f32 %v1554, %v1563
        %v1571 = vsub.f32 %v1558, %v1563
        %v1572 = vand.u32 2147483647, %v1564
        %v1573 = vand.u32 2147483647, %v1565
        %v1574 = vand.u32 2147483647, %v1566
        %v1575 = vand.u32 2147483647, %v1567
        %v1576 = vand.u32 2147483647, %v1568
        %v1577 = vand.u32 2147483647, %v1569
        %v1578 = vand.u32 2147483647, %v1570
        %v1579 = vand.u32 2147483647, %v1571
        %v1580 = vstv %s1527
        %v1581 = vmul.f32 %v1580, %v1572
        %v1582 = vmul.f32 %v1580, %v1573
        %v1583 = vmul.f32 %v1580, %v1574
        %v1584 = vmul.f32 %v1580, %v1575
        %v1585 = vmul.f32 %v1580, %v1576
        %v1586 = vmul.f32 %v1580, %v1577
        %v1587 = vmul.f32 %v1580, %v1578
        %v1588 = vmul.f32 %v1580, %v1579
        %v1589 = vadd.f32 %v1518, %v1581
        %v1590 = vadd.f32 %v1519, %v1582
        %v1591 = vadd.f32 %v1520, %v1583
        %v1592 = vadd.f32 %v1521, %v1584
        %v1593 = vadd.f32 %v1522, %v1585
        %v1594 = vadd.f32 %v1523, %v1586
        %v1595 = vadd.f32 %v1524, %v1587
        %v1596 = vadd.f32 %v1525, %v1588
        %v1597 = vld [vmem:[%s1 + $0x13] sm:$0x1]
        %s1598 = sld [smem:[#allocation5 + $0x13]]
        %1599 = vset.pattern.permute.xlu0 19
        %1600 = vperm.xlu0 %1599, %v232
        %v1601 = vpop.permute.xlu0 %1600
        %1603 = vset.pattern.permute.xlu0 19
        %1604 = vperm.xlu0 %1603, %v233
        %v1605 = vpop.permute.xlu0 %1604
        %1607 = vset.pattern.permute.xlu0 19
        %1608 = vperm.xlu0 %1607, %v234
        %v1609 = vpop.permute.xlu0 %1608
        %1611 = vset.pattern.permute.xlu0 19
        %1612 = vperm.xlu0 %1611, %v235
        %v1613 = vpop.permute.xlu0 %1612
        %1615 = vset.pattern.permute.xlu0 19
        %1616 = vperm.xlu0 %1615, %v236
        %v1617 = vpop.permute.xlu0 %1616
        %1619 = vset.pattern.permute.xlu0 19
        %1620 = vperm.xlu0 %1619, %v237
        %v1621 = vpop.permute.xlu0 %1620
        %1623 = vset.pattern.permute.xlu0 19
        %1624 = vperm.xlu0 %1623, %v238
        %v1625 = vpop.permute.xlu0 %1624
        %1627 = vset.pattern.permute.xlu0 19
        %1628 = vperm.xlu0 %1627, %v239
        %v1629 = vpop.permute.xlu0 %1628
        %v1631 = vlaneseq
        %v1632 = vshrl.u32 %v1631, 7
        %v1633 = vsub.s32 0, %v1632
        %v1634 = vrot.slane %v1597, %v1633
        %v1635 = vsub.f32 %v1601, %v1634
        %v1636 = vsub.f32 %v1605, %v1634
        %v1637 = vsub.f32 %v1609, %v1634
        %v1638 = vsub.f32 %v1613, %v1634
        %v1639 = vsub.f32 %v1617, %v1634
        %v1640 = vsub.f32 %v1621, %v1634
        %v1641 = vsub.f32 %v1625, %v1634
        %v1642 = vsub.f32 %v1629, %v1634
        %v1643 = vand.u32 2147483647, %v1635
        %v1644 = vand.u32 2147483647, %v1636
        %v1645 = vand.u32 2147483647, %v1637
        %v1646 = vand.u32 2147483647, %v1638
        %v1647 = vand.u32 2147483647, %v1639
        %v1648 = vand.u32 2147483647, %v1640
        %v1649 = vand.u32 2147483647, %v1641
        %v1650 = vand.u32 2147483647, %v1642
        %v1651 = vstv %s1598
        %v1652 = vmul.f32 %v1651, %v1643
        %v1653 = vmul.f32 %v1651, %v1644
        %v1654 = vmul.f32 %v1651, %v1645
        %v1655 = vmul.f32 %v1651, %v1646
        %v1656 = vmul.f32 %v1651, %v1647
        %v1657 = vmul.f32 %v1651, %v1648
        %v1658 = vmul.f32 %v1651, %v1649
        %v1659 = vmul.f32 %v1651, %v1650
        %v1660 = vadd.f32 %v1589, %v1652
        %v1661 = vadd.f32 %v1590, %v1653
        %v1662 = vadd.f32 %v1591, %v1654
        %v1663 = vadd.f32 %v1592, %v1655
        %v1664 = vadd.f32 %v1593, %v1656
        %v1665 = vadd.f32 %v1594, %v1657
        %v1666 = vadd.f32 %v1595, %v1658
        %v1667 = vadd.f32 %v1596, %v1659
        %v1668 = vld [vmem:[%s1 + $0x14] sm:$0x1]
        %s1669 = sld [smem:[#allocation5 + $0x14]]
        %1670 = vset.pattern.permute.xlu0 20
        %1671 = vperm.xlu0 %1670, %v232
        %v1672 = vpop.permute.xlu0 %1671
        %1674 = vset.pattern.permute.xlu0 20
        %1675 = vperm.xlu0 %1674, %v233
        %v1676 = vpop.permute.xlu0 %1675
        %1678 = vset.pattern.permute.xlu0 20
        %1679 = vperm.xlu0 %1678, %v234
        %v1680 = vpop.permute.xlu0 %1679
        %1682 = vset.pattern.permute.xlu0 20
        %1683 = vperm.xlu0 %1682, %v235
        %v1684 = vpop.permute.xlu0 %1683
        %1686 = vset.pattern.permute.xlu0 20
        %1687 = vperm.xlu0 %1686, %v236
        %v1688 = vpop.permute.xlu0 %1687
        %1690 = vset.pattern.permute.xlu0 20
        %1691 = vperm.xlu0 %1690, %v237
        %v1692 = vpop.permute.xlu0 %1691
        %1694 = vset.pattern.permute.xlu0 20
        %1695 = vperm.xlu0 %1694, %v238
        %v1696 = vpop.permute.xlu0 %1695
        %1698 = vset.pattern.permute.xlu0 20
        %1699 = vperm.xlu0 %1698, %v239
        %v1700 = vpop.permute.xlu0 %1699
        %v1702 = vlaneseq
        %v1703 = vshrl.u32 %v1702, 7
        %v1704 = vsub.s32 0, %v1703
        %v1705 = vrot.slane %v1668, %v1704
        %v1706 = vsub.f32 %v1672, %v1705
        %v1707 = vsub.f32 %v1676, %v1705
        %v1708 = vsub.f32 %v1680, %v1705
        %v1709 = vsub.f32 %v1684, %v1705
        %v1710 = vsub.f32 %v1688, %v1705
        %v1711 = vsub.f32 %v1692, %v1705
        %v1712 = vsub.f32 %v1696, %v1705
        %v1713 = vsub.f32 %v1700, %v1705
        %v1714 = vand.u32 2147483647, %v1706
        %v1715 = vand.u32 2147483647, %v1707
        %v1716 = vand.u32 2147483647, %v1708
        %v1717 = vand.u32 2147483647, %v1709
        %v1718 = vand.u32 2147483647, %v1710
        %v1719 = vand.u32 2147483647, %v1711
        %v1720 = vand.u32 2147483647, %v1712
        %v1721 = vand.u32 2147483647, %v1713
        %v1722 = vstv %s1669
        %v1723 = vmul.f32 %v1722, %v1714
        %v1724 = vmul.f32 %v1722, %v1715
        %v1725 = vmul.f32 %v1722, %v1716
        %v1726 = vmul.f32 %v1722, %v1717
        %v1727 = vmul.f32 %v1722, %v1718
        %v1728 = vmul.f32 %v1722, %v1719
        %v1729 = vmul.f32 %v1722, %v1720
        %v1730 = vmul.f32 %v1722, %v1721
        %v1731 = vadd.f32 %v1660, %v1723
        %v1732 = vadd.f32 %v1661, %v1724
        %v1733 = vadd.f32 %v1662, %v1725
        %v1734 = vadd.f32 %v1663, %v1726
        %v1735 = vadd.f32 %v1664, %v1727
        %v1736 = vadd.f32 %v1665, %v1728
        %v1737 = vadd.f32 %v1666, %v1729
        %v1738 = vadd.f32 %v1667, %v1730
        %v1739 = vld [vmem:[%s1 + $0x15] sm:$0x1]
        %s1740 = sld [smem:[#allocation5 + $0x15]]
        %1741 = vset.pattern.permute.xlu0 21
        %1742 = vperm.xlu0 %1741, %v232
        %v1743 = vpop.permute.xlu0 %1742
        %1745 = vset.pattern.permute.xlu0 21
        %1746 = vperm.xlu0 %1745, %v233
        %v1747 = vpop.permute.xlu0 %1746
        %1749 = vset.pattern.permute.xlu0 21
        %1750 = vperm.xlu0 %1749, %v234
        %v1751 = vpop.permute.xlu0 %1750
        %1753 = vset.pattern.permute.xlu0 21
        %1754 = vperm.xlu0 %1753, %v235
        %v1755 = vpop.permute.xlu0 %1754
        %1757 = vset.pattern.permute.xlu0 21
        %1758 = vperm.xlu0 %1757, %v236
        %v1759 = vpop.permute.xlu0 %1758
        %1761 = vset.pattern.permute.xlu0 21
        %1762 = vperm.xlu0 %1761, %v237
        %v1763 = vpop.permute.xlu0 %1762
        %1765 = vset.pattern.permute.xlu0 21
        %1766 = vperm.xlu0 %1765, %v238
        %v1767 = vpop.permute.xlu0 %1766
        %1769 = vset.pattern.permute.xlu0 21
        %1770 = vperm.xlu0 %1769, %v239
        %v1771 = vpop.permute.xlu0 %1770
        %v1773 = vlaneseq
        %v1774 = vshrl.u32 %v1773, 7
        %v1775 = vsub.s32 0, %v1774
        %v1776 = vrot.slane %v1739, %v1775
        %v1777 = vsub.f32 %v1743, %v1776
        %v1778 = vsub.f32 %v1747, %v1776
        %v1779 = vsub.f32 %v1751, %v1776
        %v1780 = vsub.f32 %v1755, %v1776
        %v1781 = vsub.f32 %v1759, %v1776
        %v1782 = vsub.f32 %v1763, %v1776
        %v1783 = vsub.f32 %v1767, %v1776
        %v1784 = vsub.f32 %v1771, %v1776
        %v1785 = vand.u32 2147483647, %v1777
        %v1786 = vand.u32 2147483647, %v1778
        %v1787 = vand.u32 2147483647, %v1779
        %v1788 = vand.u32 2147483647, %v1780
        %v1789 = vand.u32 2147483647, %v1781
        %v1790 = vand.u32 2147483647, %v1782
        %v1791 = vand.u32 2147483647, %v1783
        %v1792 = vand.u32 2147483647, %v1784
        %v1793 = vstv %s1740
        %v1794 = vmul.f32 %v1793, %v1785
        %v1795 = vmul.f32 %v1793, %v1786
        %v1796 = vmul.f32 %v1793, %v1787
        %v1797 = vmul.f32 %v1793, %v1788
        %v1798 = vmul.f32 %v1793, %v1789
        %v1799 = vmul.f32 %v1793, %v1790
        %v1800 = vmul.f32 %v1793, %v1791
        %v1801 = vmul.f32 %v1793, %v1792
        %v1802 = vadd.f32 %v1731, %v1794
        %v1803 = vadd.f32 %v1732, %v1795
        %v1804 = vadd.f32 %v1733, %v1796
        %v1805 = vadd.f32 %v1734, %v1797
        %v1806 = vadd.f32 %v1735, %v1798
        %v1807 = vadd.f32 %v1736, %v1799
        %v1808 = vadd.f32 %v1737, %v1800
        %v1809 = vadd.f32 %v1738, %v1801
        %v1810 = vld [vmem:[%s1 + $0x16] sm:$0x1]
        %s1811 = sld [smem:[#allocation5 + $0x16]]
        %1812 = vset.pattern.permute.xlu0 22
        %1813 = vperm.xlu0 %1812, %v232
        %v1814 = vpop.permute.xlu0 %1813
        %1816 = vset.pattern.permute.xlu0 22
        %1817 = vperm.xlu0 %1816, %v233
        %v1818 = vpop.permute.xlu0 %1817
        %1820 = vset.pattern.permute.xlu0 22
        %1821 = vperm.xlu0 %1820, %v234
        %v1822 = vpop.permute.xlu0 %1821
        %1824 = vset.pattern.permute.xlu0 22
        %1825 = vperm.xlu0 %1824, %v235
        %v1826 = vpop.permute.xlu0 %1825
        %1828 = vset.pattern.permute.xlu0 22
        %1829 = vperm.xlu0 %1828, %v236
        %v1830 = vpop.permute.xlu0 %1829
        %1832 = vset.pattern.permute.xlu0 22
        %1833 = vperm.xlu0 %1832, %v237
        %v1834 = vpop.permute.xlu0 %1833
        %1836 = vset.pattern.permute.xlu0 22
        %1837 = vperm.xlu0 %1836, %v238
        %v1838 = vpop.permute.xlu0 %1837
        %1840 = vset.pattern.permute.xlu0 22
        %1841 = vperm.xlu0 %1840, %v239
        %v1842 = vpop.permute.xlu0 %1841
        %v1844 = vlaneseq
        %v1845 = vshrl.u32 %v1844, 7
        %v1846 = vsub.s32 0, %v1845
        %v1847 = vrot.slane %v1810, %v1846
        %v1848 = vsub.f32 %v1814, %v1847
        %v1849 = vsub.f32 %v1818, %v1847
        %v1850 = vsub.f32 %v1822, %v1847
        %v1851 = vsub.f32 %v1826, %v1847
        %v1852 = vsub.f32 %v1830, %v1847
        %v1853 = vsub.f32 %v1834, %v1847
        %v1854 = vsub.f32 %v1838, %v1847
        %v1855 = vsub.f32 %v1842, %v1847
        %v1856 = vand.u32 2147483647, %v1848
        %v1857 = vand.u32 2147483647, %v1849
        %v1858 = vand.u32 2147483647, %v1850
        %v1859 = vand.u32 2147483647, %v1851
        %v1860 = vand.u32 2147483647, %v1852
        %v1861 = vand.u32 2147483647, %v1853
        %v1862 = vand.u32 2147483647, %v1854
        %v1863 = vand.u32 2147483647, %v1855
        %v1864 = vstv %s1811
        %v1865 = vmul.f32 %v1864, %v1856
        %v1866 = vmul.f32 %v1864, %v1857
        %v1867 = vmul.f32 %v1864, %v1858
        %v1868 = vmul.f32 %v1864, %v1859
        %v1869 = vmul.f32 %v1864, %v1860
        %v1870 = vmul.f32 %v1864, %v1861
        %v1871 = vmul.f32 %v1864, %v1862
        %v1872 = vmul.f32 %v1864, %v1863
        %v1873 = vadd.f32 %v1802, %v1865
        %v1874 = vadd.f32 %v1803, %v1866
        %v1875 = vadd.f32 %v1804, %v1867
        %v1876 = vadd.f32 %v1805, %v1868
        %v1877 = vadd.f32 %v1806, %v1869
        %v1878 = vadd.f32 %v1807, %v1870
        %v1879 = vadd.f32 %v1808, %v1871
        %v1880 = vadd.f32 %v1809, %v1872
        %v1881 = vld [vmem:[%s1 + $0x17] sm:$0x1]
        %s1882 = sld [smem:[#allocation5 + $0x17]]
        %1883 = vset.pattern.permute.xlu0 23
        %1884 = vperm.xlu0 %1883, %v232
        %v1885 = vpop.permute.xlu0 %1884
        %1887 = vset.pattern.permute.xlu0 23
        %1888 = vperm.xlu0 %1887, %v233
        %v1889 = vpop.permute.xlu0 %1888
        %1891 = vset.pattern.permute.xlu0 23
        %1892 = vperm.xlu0 %1891, %v234
        %v1893 = vpop.permute.xlu0 %1892
        %1895 = vset.pattern.permute.xlu0 23
        %1896 = vperm.xlu0 %1895, %v235
        %v1897 = vpop.permute.xlu0 %1896
        %1899 = vset.pattern.permute.xlu0 23
        %1900 = vperm.xlu0 %1899, %v236
        %v1901 = vpop.permute.xlu0 %1900
        %1903 = vset.pattern.permute.xlu0 23
        %1904 = vperm.xlu0 %1903, %v237
        %v1905 = vpop.permute.xlu0 %1904
        %1907 = vset.pattern.permute.xlu0 23
        %1908 = vperm.xlu0 %1907, %v238
        %v1909 = vpop.permute.xlu0 %1908
        %1911 = vset.pattern.permute.xlu0 23
        %1912 = vperm.xlu0 %1911, %v239
        %v1913 = vpop.permute.xlu0 %1912
        %v1915 = vlaneseq
        %v1916 = vshrl.u32 %v1915, 7
        %v1917 = vsub.s32 0, %v1916
        %v1918 = vrot.slane %v1881, %v1917
        %v1919 = vsub.f32 %v1885, %v1918
        %v1920 = vsub.f32 %v1889, %v1918
        %v1921 = vsub.f32 %v1893, %v1918
        %v1922 = vsub.f32 %v1897, %v1918
        %v1923 = vsub.f32 %v1901, %v1918
        %v1924 = vsub.f32 %v1905, %v1918
        %v1925 = vsub.f32 %v1909, %v1918
        %v1926 = vsub.f32 %v1913, %v1918
        %v1927 = vand.u32 2147483647, %v1919
        %v1928 = vand.u32 2147483647, %v1920
        %v1929 = vand.u32 2147483647, %v1921
        %v1930 = vand.u32 2147483647, %v1922
        %v1931 = vand.u32 2147483647, %v1923
        %v1932 = vand.u32 2147483647, %v1924
        %v1933 = vand.u32 2147483647, %v1925
        %v1934 = vand.u32 2147483647, %v1926
        %v1935 = vstv %s1882
        %v1936 = vmul.f32 %v1935, %v1927
        %v1937 = vmul.f32 %v1935, %v1928
        %v1938 = vmul.f32 %v1935, %v1929
        %v1939 = vmul.f32 %v1935, %v1930
        %v1940 = vmul.f32 %v1935, %v1931
        %v1941 = vmul.f32 %v1935, %v1932
        %v1942 = vmul.f32 %v1935, %v1933
        %v1943 = vmul.f32 %v1935, %v1934
        %v1944 = vadd.f32 %v1873, %v1936
        %v1945 = vadd.f32 %v1874, %v1937
        %v1946 = vadd.f32 %v1875, %v1938
        %v1947 = vadd.f32 %v1876, %v1939
        %v1948 = vadd.f32 %v1877, %v1940
        %v1949 = vadd.f32 %v1878, %v1941
        %v1950 = vadd.f32 %v1879, %v1942
        %v1951 = vadd.f32 %v1880, %v1943
        %v1952 = vld [vmem:[%s1 + $0x18] sm:$0x1]
        %s1953 = sld [smem:[#allocation5 + $0x18]]
        %1954 = vset.pattern.permute.xlu0 24
        %1955 = vperm.xlu0 %1954, %v232
        %v1956 = vpop.permute.xlu0 %1955
        %1958 = vset.pattern.permute.xlu0 24
        %1959 = vperm.xlu0 %1958, %v233
        %v1960 = vpop.permute.xlu0 %1959
        %1962 = vset.pattern.permute.xlu0 24
        %1963 = vperm.xlu0 %1962, %v234
        %v1964 = vpop.permute.xlu0 %1963
        %1966 = vset.pattern.permute.xlu0 24
        %1967 = vperm.xlu0 %1966, %v235
        %v1968 = vpop.permute.xlu0 %1967
        %1970 = vset.pattern.permute.xlu0 24
        %1971 = vperm.xlu0 %1970, %v236
        %v1972 = vpop.permute.xlu0 %1971
        %1974 = vset.pattern.permute.xlu0 24
        %1975 = vperm.xlu0 %1974, %v237
        %v1976 = vpop.permute.xlu0 %1975
        %1978 = vset.pattern.permute.xlu0 24
        %1979 = vperm.xlu0 %1978, %v238
        %v1980 = vpop.permute.xlu0 %1979
        %1982 = vset.pattern.permute.xlu0 24
        %1983 = vperm.xlu0 %1982, %v239
        %v1984 = vpop.permute.xlu0 %1983
        %v1986 = vlaneseq
        %v1987 = vshrl.u32 %v1986, 7
        %v1988 = vsub.s32 0, %v1987
        %v1989 = vrot.slane %v1952, %v1988
        %v1990 = vsub.f32 %v1956, %v1989
        %v1991 = vsub.f32 %v1960, %v1989
        %v1992 = vsub.f32 %v1964, %v1989
        %v1993 = vsub.f32 %v1968, %v1989
        %v1994 = vsub.f32 %v1972, %v1989
        %v1995 = vsub.f32 %v1976, %v1989
        %v1996 = vsub.f32 %v1980, %v1989
        %v1997 = vsub.f32 %v1984, %v1989
        %v1998 = vand.u32 2147483647, %v1990
        %v1999 = vand.u32 2147483647, %v1991
        %v2000 = vand.u32 2147483647, %v1992
        %v2001 = vand.u32 2147483647, %v1993
        %v2002 = vand.u32 2147483647, %v1994
        %v2003 = vand.u32 2147483647, %v1995
        %v2004 = vand.u32 2147483647, %v1996
        %v2005 = vand.u32 2147483647, %v1997
        %v2006 = vstv %s1953
        %v2007 = vmul.f32 %v2006, %v1998
        %v2008 = vmul.f32 %v2006, %v1999
        %v2009 = vmul.f32 %v2006, %v2000
        %v2010 = vmul.f32 %v2006, %v2001
        %v2011 = vmul.f32 %v2006, %v2002
        %v2012 = vmul.f32 %v2006, %v2003
        %v2013 = vmul.f32 %v2006, %v2004
        %v2014 = vmul.f32 %v2006, %v2005
        %v2015 = vadd.f32 %v1944, %v2007
        %v2016 = vadd.f32 %v1945, %v2008
        %v2017 = vadd.f32 %v1946, %v2009
        %v2018 = vadd.f32 %v1947, %v2010
        %v2019 = vadd.f32 %v1948, %v2011
        %v2020 = vadd.f32 %v1949, %v2012
        %v2021 = vadd.f32 %v1950, %v2013
        %v2022 = vadd.f32 %v1951, %v2014
        %v2023 = vld [vmem:[%s1 + $0x19] sm:$0x1]
        %s2024 = sld [smem:[#allocation5 + $0x19]]
        %2025 = vset.pattern.permute.xlu0 25
        %2026 = vperm.xlu0 %2025, %v232
        %v2027 = vpop.permute.xlu0 %2026
        %2029 = vset.pattern.permute.xlu0 25
        %2030 = vperm.xlu0 %2029, %v233
        %v2031 = vpop.permute.xlu0 %2030
        %2033 = vset.pattern.permute.xlu0 25
        %2034 = vperm.xlu0 %2033, %v234
        %v2035 = vpop.permute.xlu0 %2034
        %2037 = vset.pattern.permute.xlu0 25
        %2038 = vperm.xlu0 %2037, %v235
        %v2039 = vpop.permute.xlu0 %2038
        %2041 = vset.pattern.permute.xlu0 25
        %2042 = vperm.xlu0 %2041, %v236
        %v2043 = vpop.permute.xlu0 %2042
        %2045 = vset.pattern.permute.xlu0 25
        %2046 = vperm.xlu0 %2045, %v237
        %v2047 = vpop.permute.xlu0 %2046
        %2049 = vset.pattern.permute.xlu0 25
        %2050 = vperm.xlu0 %2049, %v238
        %v2051 = vpop.permute.xlu0 %2050
        %2053 = vset.pattern.permute.xlu0 25
        %2054 = vperm.xlu0 %2053, %v239
        %v2055 = vpop.permute.xlu0 %2054
        %v2057 = vlaneseq
        %v2058 = vshrl.u32 %v2057, 7
        %v2059 = vsub.s32 0, %v2058
        %v2060 = vrot.slane %v2023, %v2059
        %v2061 = vsub.f32 %v2027, %v2060
        %v2062 = vsub.f32 %v2031, %v2060
        %v2063 = vsub.f32 %v2035, %v2060
        %v2064 = vsub.f32 %v2039, %v2060
        %v2065 = vsub.f32 %v2043, %v2060
        %v2066 = vsub.f32 %v2047, %v2060
        %v2067 = vsub.f32 %v2051, %v2060
        %v2068 = vsub.f32 %v2055, %v2060
        %v2069 = vand.u32 2147483647, %v2061
        %v2070 = vand.u32 2147483647, %v2062
        %v2071 = vand.u32 2147483647, %v2063
        %v2072 = vand.u32 2147483647, %v2064
        %v2073 = vand.u32 2147483647, %v2065
        %v2074 = vand.u32 2147483647, %v2066
        %v2075 = vand.u32 2147483647, %v2067
        %v2076 = vand.u32 2147483647, %v2068
        %v2077 = vstv %s2024
        %v2078 = vmul.f32 %v2077, %v2069
        %v2079 = vmul.f32 %v2077, %v2070
        %v2080 = vmul.f32 %v2077, %v2071
        %v2081 = vmul.f32 %v2077, %v2072
        %v2082 = vmul.f32 %v2077, %v2073
        %v2083 = vmul.f32 %v2077, %v2074
        %v2084 = vmul.f32 %v2077, %v2075
        %v2085 = vmul.f32 %v2077, %v2076
        %v2086 = vadd.f32 %v2015, %v2078
        %v2087 = vadd.f32 %v2016, %v2079
        %v2088 = vadd.f32 %v2017, %v2080
        %v2089 = vadd.f32 %v2018, %v2081
        %v2090 = vadd.f32 %v2019, %v2082
        %v2091 = vadd.f32 %v2020, %v2083
        %v2092 = vadd.f32 %v2021, %v2084
        %v2093 = vadd.f32 %v2022, %v2085
        %v2094 = vld [vmem:[%s1 + $0x1a] sm:$0x1]
        %s2095 = sld [smem:[#allocation5 + $0x1a]]
        %2096 = vset.pattern.permute.xlu0 26
        %2097 = vperm.xlu0 %2096, %v232
        %v2098 = vpop.permute.xlu0 %2097
        %2100 = vset.pattern.permute.xlu0 26
        %2101 = vperm.xlu0 %2100, %v233
        %v2102 = vpop.permute.xlu0 %2101
        %2104 = vset.pattern.permute.xlu0 26
        %2105 = vperm.xlu0 %2104, %v234
        %v2106 = vpop.permute.xlu0 %2105
        %2108 = vset.pattern.permute.xlu0 26
        %2109 = vperm.xlu0 %2108, %v235
        %v2110 = vpop.permute.xlu0 %2109
        %2112 = vset.pattern.permute.xlu0 26
        %2113 = vperm.xlu0 %2112, %v236
        %v2114 = vpop.permute.xlu0 %2113
        %2116 = vset.pattern.permute.xlu0 26
        %2117 = vperm.xlu0 %2116, %v237
        %v2118 = vpop.permute.xlu0 %2117
        %2120 = vset.pattern.permute.xlu0 26
        %2121 = vperm.xlu0 %2120, %v238
        %v2122 = vpop.permute.xlu0 %2121
        %2124 = vset.pattern.permute.xlu0 26
        %2125 = vperm.xlu0 %2124, %v239
        %v2126 = vpop.permute.xlu0 %2125
        %v2128 = vlaneseq
        %v2129 = vshrl.u32 %v2128, 7
        %v2130 = vsub.s32 0, %v2129
        %v2131 = vrot.slane %v2094, %v2130
        %v2132 = vsub.f32 %v2098, %v2131
        %v2133 = vsub.f32 %v2102, %v2131
        %v2134 = vsub.f32 %v2106, %v2131
        %v2135 = vsub.f32 %v2110, %v2131
        %v2136 = vsub.f32 %v2114, %v2131
        %v2137 = vsub.f32 %v2118, %v2131
        %v2138 = vsub.f32 %v2122, %v2131
        %v2139 = vsub.f32 %v2126, %v2131
        %v2140 = vand.u32 2147483647, %v2132
        %v2141 = vand.u32 2147483647, %v2133
        %v2142 = vand.u32 2147483647, %v2134
        %v2143 = vand.u32 2147483647, %v2135
        %v2144 = vand.u32 2147483647, %v2136
        %v2145 = vand.u32 2147483647, %v2137
        %v2146 = vand.u32 2147483647, %v2138
        %v2147 = vand.u32 2147483647, %v2139
        %v2148 = vstv %s2095
        %v2149 = vmul.f32 %v2148, %v2140
        %v2150 = vmul.f32 %v2148, %v2141
        %v2151 = vmul.f32 %v2148, %v2142
        %v2152 = vmul.f32 %v2148, %v2143
        %v2153 = vmul.f32 %v2148, %v2144
        %v2154 = vmul.f32 %v2148, %v2145
        %v2155 = vmul.f32 %v2148, %v2146
        %v2156 = vmul.f32 %v2148, %v2147
        %v2157 = vadd.f32 %v2086, %v2149
        %v2158 = vadd.f32 %v2087, %v2150
        %v2159 = vadd.f32 %v2088, %v2151
        %v2160 = vadd.f32 %v2089, %v2152
        %v2161 = vadd.f32 %v2090, %v2153
        %v2162 = vadd.f32 %v2091, %v2154
        %v2163 = vadd.f32 %v2092, %v2155
        %v2164 = vadd.f32 %v2093, %v2156
        %v2165 = vld [vmem:[%s1 + $0x1b] sm:$0x1]
        %s2166 = sld [smem:[#allocation5 + $0x1b]]
        %2167 = vset.pattern.permute.xlu0 27
        %2168 = vperm.xlu0 %2167, %v232
        %v2169 = vpop.permute.xlu0 %2168
        %2171 = vset.pattern.permute.xlu0 27
        %2172 = vperm.xlu0 %2171, %v233
        %v2173 = vpop.permute.xlu0 %2172
        %2175 = vset.pattern.permute.xlu0 27
        %2176 = vperm.xlu0 %2175, %v234
        %v2177 = vpop.permute.xlu0 %2176
        %2179 = vset.pattern.permute.xlu0 27
        %2180 = vperm.xlu0 %2179, %v235
        %v2181 = vpop.permute.xlu0 %2180
        %2183 = vset.pattern.permute.xlu0 27
        %2184 = vperm.xlu0 %2183, %v236
        %v2185 = vpop.permute.xlu0 %2184
        %2187 = vset.pattern.permute.xlu0 27
        %2188 = vperm.xlu0 %2187, %v237
        %v2189 = vpop.permute.xlu0 %2188
        %2191 = vset.pattern.permute.xlu0 27
        %2192 = vperm.xlu0 %2191, %v238
        %v2193 = vpop.permute.xlu0 %2192
        %2195 = vset.pattern.permute.xlu0 27
        %2196 = vperm.xlu0 %2195, %v239
        %v2197 = vpop.permute.xlu0 %2196
        %v2199 = vlaneseq
        %v2200 = vshrl.u32 %v2199, 7
        %v2201 = vsub.s32 0, %v2200
        %v2202 = vrot.slane %v2165, %v2201
        %v2203 = vsub.f32 %v2169, %v2202
        %v2204 = vsub.f32 %v2173, %v2202
        %v2205 = vsub.f32 %v2177, %v2202
        %v2206 = vsub.f32 %v2181, %v2202
        %v2207 = vsub.f32 %v2185, %v2202
        %v2208 = vsub.f32 %v2189, %v2202
        %v2209 = vsub.f32 %v2193, %v2202
        %v2210 = vsub.f32 %v2197, %v2202
        %v2211 = vand.u32 2147483647, %v2203
        %v2212 = vand.u32 2147483647, %v2204
        %v2213 = vand.u32 2147483647, %v2205
        %v2214 = vand.u32 2147483647, %v2206
        %v2215 = vand.u32 2147483647, %v2207
        %v2216 = vand.u32 2147483647, %v2208
        %v2217 = vand.u32 2147483647, %v2209
        %v2218 = vand.u32 2147483647, %v2210
        %v2219 = vstv %s2166
        %v2220 = vmul.f32 %v2219, %v2211
        %v2221 = vmul.f32 %v2219, %v2212
        %v2222 = vmul.f32 %v2219, %v2213
        %v2223 = vmul.f32 %v2219, %v2214
        %v2224 = vmul.f32 %v2219, %v2215
        %v2225 = vmul.f32 %v2219, %v2216
        %v2226 = vmul.f32 %v2219, %v2217
        %v2227 = vmul.f32 %v2219, %v2218
        %v2228 = vadd.f32 %v2157, %v2220
        %v2229 = vadd.f32 %v2158, %v2221
        %v2230 = vadd.f32 %v2159, %v2222
        %v2231 = vadd.f32 %v2160, %v2223
        %v2232 = vadd.f32 %v2161, %v2224
        %v2233 = vadd.f32 %v2162, %v2225
        %v2234 = vadd.f32 %v2163, %v2226
        %v2235 = vadd.f32 %v2164, %v2227
        %v2236 = vld [vmem:[%s1 + $0x1c] sm:$0x1]
        %s2237 = sld [smem:[#allocation5 + $0x1c]]
        %2238 = vset.pattern.permute.xlu0 28
        %2239 = vperm.xlu0 %2238, %v232
        %v2240 = vpop.permute.xlu0 %2239
        %2242 = vset.pattern.permute.xlu0 28
        %2243 = vperm.xlu0 %2242, %v233
        %v2244 = vpop.permute.xlu0 %2243
        %2246 = vset.pattern.permute.xlu0 28
        %2247 = vperm.xlu0 %2246, %v234
        %v2248 = vpop.permute.xlu0 %2247
        %2250 = vset.pattern.permute.xlu0 28
        %2251 = vperm.xlu0 %2250, %v235
        %v2252 = vpop.permute.xlu0 %2251
        %2254 = vset.pattern.permute.xlu0 28
        %2255 = vperm.xlu0 %2254, %v236
        %v2256 = vpop.permute.xlu0 %2255
        %2258 = vset.pattern.permute.xlu0 28
        %2259 = vperm.xlu0 %2258, %v237
        %v2260 = vpop.permute.xlu0 %2259
        %2262 = vset.pattern.permute.xlu0 28
        %2263 = vperm.xlu0 %2262, %v238
        %v2264 = vpop.permute.xlu0 %2263
        %2266 = vset.pattern.permute.xlu0 28
        %2267 = vperm.xlu0 %2266, %v239
        %v2268 = vpop.permute.xlu0 %2267
        %v2270 = vlaneseq
        %v2271 = vshrl.u32 %v2270, 7
        %v2272 = vsub.s32 0, %v2271
        %v2273 = vrot.slane %v2236, %v2272
        %v2274 = vsub.f32 %v2240, %v2273
        %v2275 = vsub.f32 %v2244, %v2273
        %v2276 = vsub.f32 %v2248, %v2273
        %v2277 = vsub.f32 %v2252, %v2273
        %v2278 = vsub.f32 %v2256, %v2273
        %v2279 = vsub.f32 %v2260, %v2273
        %v2280 = vsub.f32 %v2264, %v2273
        %v2281 = vsub.f32 %v2268, %v2273
        %v2282 = vand.u32 2147483647, %v2274
        %v2283 = vand.u32 2147483647, %v2275
        %v2284 = vand.u32 2147483647, %v2276
        %v2285 = vand.u32 2147483647, %v2277
        %v2286 = vand.u32 2147483647, %v2278
        %v2287 = vand.u32 2147483647, %v2279
        %v2288 = vand.u32 2147483647, %v2280
        %v2289 = vand.u32 2147483647, %v2281
        %v2290 = vstv %s2237
        %v2291 = vmul.f32 %v2290, %v2282
        %v2292 = vmul.f32 %v2290, %v2283
        %v2293 = vmul.f32 %v2290, %v2284
        %v2294 = vmul.f32 %v2290, %v2285
        %v2295 = vmul.f32 %v2290, %v2286
        %v2296 = vmul.f32 %v2290, %v2287
        %v2297 = vmul.f32 %v2290, %v2288
        %v2298 = vmul.f32 %v2290, %v2289
        %v2299 = vadd.f32 %v2228, %v2291
        %v2300 = vadd.f32 %v2229, %v2292
        %v2301 = vadd.f32 %v2230, %v2293
        %v2302 = vadd.f32 %v2231, %v2294
        %v2303 = vadd.f32 %v2232, %v2295
        %v2304 = vadd.f32 %v2233, %v2296
        %v2305 = vadd.f32 %v2234, %v2297
        %v2306 = vadd.f32 %v2235, %v2298
        %v2307 = vld [vmem:[%s1 + $0x1d] sm:$0x1]
        %s2308 = sld [smem:[#allocation5 + $0x1d]]
        %2309 = vset.pattern.permute.xlu0 29
        %2310 = vperm.xlu0 %2309, %v232
        %v2311 = vpop.permute.xlu0 %2310
        %2313 = vset.pattern.permute.xlu0 29
        %2314 = vperm.xlu0 %2313, %v233
        %v2315 = vpop.permute.xlu0 %2314
        %2317 = vset.pattern.permute.xlu0 29
        %2318 = vperm.xlu0 %2317, %v234
        %v2319 = vpop.permute.xlu0 %2318
        %2321 = vset.pattern.permute.xlu0 29
        %2322 = vperm.xlu0 %2321, %v235
        %v2323 = vpop.permute.xlu0 %2322
        %2325 = vset.pattern.permute.xlu0 29
        %2326 = vperm.xlu0 %2325, %v236
        %v2327 = vpop.permute.xlu0 %2326
        %2329 = vset.pattern.permute.xlu0 29
        %2330 = vperm.xlu0 %2329, %v237
        %v2331 = vpop.permute.xlu0 %2330
        %2333 = vset.pattern.permute.xlu0 29
        %2334 = vperm.xlu0 %2333, %v238
        %v2335 = vpop.permute.xlu0 %2334
        %2337 = vset.pattern.permute.xlu0 29
        %2338 = vperm.xlu0 %2337, %v239
        %v2339 = vpop.permute.xlu0 %2338
        %v2341 = vlaneseq
        %v2342 = vshrl.u32 %v2341, 7
        %v2343 = vsub.s32 0, %v2342
        %v2344 = vrot.slane %v2307, %v2343
        %v2345 = vsub.f32 %v2311, %v2344
        %v2346 = vsub.f32 %v2315, %v2344
        %v2347 = vsub.f32 %v2319, %v2344
        %v2348 = vsub.f32 %v2323, %v2344
        %v2349 = vsub.f32 %v2327, %v2344
        %v2350 = vsub.f32 %v2331, %v2344
        %v2351 = vsub.f32 %v2335, %v2344
        %v2352 = vsub.f32 %v2339, %v2344
        %v2353 = vand.u32 2147483647, %v2345
        %v2354 = vand.u32 2147483647, %v2346
        %v2355 = vand.u32 2147483647, %v2347
        %v2356 = vand.u32 2147483647, %v2348
        %v2357 = vand.u32 2147483647, %v2349
        %v2358 = vand.u32 2147483647, %v2350
        %v2359 = vand.u32 2147483647, %v2351
        %v2360 = vand.u32 2147483647, %v2352
        %v2361 = vstv %s2308
        %v2362 = vmul.f32 %v2361, %v2353
        %v2363 = vmul.f32 %v2361, %v2354
        %v2364 = vmul.f32 %v2361, %v2355
        %v2365 = vmul.f32 %v2361, %v2356
        %v2366 = vmul.f32 %v2361, %v2357
        %v2367 = vmul.f32 %v2361, %v2358
        %v2368 = vmul.f32 %v2361, %v2359
        %v2369 = vmul.f32 %v2361, %v2360
        %v2370 = vadd.f32 %v2299, %v2362
        %v2371 = vadd.f32 %v2300, %v2363
        %v2372 = vadd.f32 %v2301, %v2364
        %v2373 = vadd.f32 %v2302, %v2365
        %v2374 = vadd.f32 %v2303, %v2366
        %v2375 = vadd.f32 %v2304, %v2367
        %v2376 = vadd.f32 %v2305, %v2368
        %v2377 = vadd.f32 %v2306, %v2369
        %v2378 = vld [vmem:[%s1 + $0x1e] sm:$0x1]
        %s2379 = sld [smem:[#allocation5 + $0x1e]]
        %2380 = vset.pattern.permute.xlu0 30
        %2381 = vperm.xlu0 %2380, %v232
        %v2382 = vpop.permute.xlu0 %2381
        %2384 = vset.pattern.permute.xlu0 30
        %2385 = vperm.xlu0 %2384, %v233
        %v2386 = vpop.permute.xlu0 %2385
        %2388 = vset.pattern.permute.xlu0 30
        %2389 = vperm.xlu0 %2388, %v234
        %v2390 = vpop.permute.xlu0 %2389
        %2392 = vset.pattern.permute.xlu0 30
        %2393 = vperm.xlu0 %2392, %v235
        %v2394 = vpop.permute.xlu0 %2393
        %2396 = vset.pattern.permute.xlu0 30
        %2397 = vperm.xlu0 %2396, %v236
        %v2398 = vpop.permute.xlu0 %2397
        %2400 = vset.pattern.permute.xlu0 30
        %2401 = vperm.xlu0 %2400, %v237
        %v2402 = vpop.permute.xlu0 %2401
        %2404 = vset.pattern.permute.xlu0 30
        %2405 = vperm.xlu0 %2404, %v238
        %v2406 = vpop.permute.xlu0 %2405
        %2408 = vset.pattern.permute.xlu0 30
        %2409 = vperm.xlu0 %2408, %v239
        %v2410 = vpop.permute.xlu0 %2409
        %v2412 = vlaneseq
        %v2413 = vshrl.u32 %v2412, 7
        %v2414 = vsub.s32 0, %v2413
        %v2415 = vrot.slane %v2378, %v2414
        %v2416 = vsub.f32 %v2382, %v2415
        %v2417 = vsub.f32 %v2386, %v2415
        %v2418 = vsub.f32 %v2390, %v2415
        %v2419 = vsub.f32 %v2394, %v2415
        %v2420 = vsub.f32 %v2398, %v2415
        %v2421 = vsub.f32 %v2402, %v2415
        %v2422 = vsub.f32 %v2406, %v2415
        %v2423 = vsub.f32 %v2410, %v2415
        %v2424 = vand.u32 2147483647, %v2416
        %v2425 = vand.u32 2147483647, %v2417
        %v2426 = vand.u32 2147483647, %v2418
        %v2427 = vand.u32 2147483647, %v2419
        %v2428 = vand.u32 2147483647, %v2420
        %v2429 = vand.u32 2147483647, %v2421
        %v2430 = vand.u32 2147483647, %v2422
        %v2431 = vand.u32 2147483647, %v2423
        %v2432 = vstv %s2379
        %v2433 = vmul.f32 %v2432, %v2424
        %v2434 = vmul.f32 %v2432, %v2425
        %v2435 = vmul.f32 %v2432, %v2426
        %v2436 = vmul.f32 %v2432, %v2427
        %v2437 = vmul.f32 %v2432, %v2428
        %v2438 = vmul.f32 %v2432, %v2429
        %v2439 = vmul.f32 %v2432, %v2430
        %v2440 = vmul.f32 %v2432, %v2431
        %v2441 = vadd.f32 %v2370, %v2433
        %v2442 = vadd.f32 %v2371, %v2434
        %v2443 = vadd.f32 %v2372, %v2435
        %v2444 = vadd.f32 %v2373, %v2436
        %v2445 = vadd.f32 %v2374, %v2437
        %v2446 = vadd.f32 %v2375, %v2438
        %v2447 = vadd.f32 %v2376, %v2439
        %v2448 = vadd.f32 %v2377, %v2440
        %v2449 = vld [vmem:[%s1 + $0x1f] sm:$0x1]
        %s2450 = sld [smem:[#allocation5 + $0x1f]]
        %2451 = vset.pattern.permute.xlu0 31
        %2452 = vperm.xlu0 %2451, %v232
        %v2453 = vpop.permute.xlu0 %2452
        %2455 = vset.pattern.permute.xlu0 31
        %2456 = vperm.xlu0 %2455, %v233
        %v2457 = vpop.permute.xlu0 %2456
        %2459 = vset.pattern.permute.xlu0 31
        %2460 = vperm.xlu0 %2459, %v234
        %v2461 = vpop.permute.xlu0 %2460
        %2463 = vset.pattern.permute.xlu0 31
        %2464 = vperm.xlu0 %2463, %v235
        %v2465 = vpop.permute.xlu0 %2464
        %2467 = vset.pattern.permute.xlu0 31
        %2468 = vperm.xlu0 %2467, %v236
        %v2469 = vpop.permute.xlu0 %2468
        %2471 = vset.pattern.permute.xlu0 31
        %2472 = vperm.xlu0 %2471, %v237
        %v2473 = vpop.permute.xlu0 %2472
        %2475 = vset.pattern.permute.xlu0 31
        %2476 = vperm.xlu0 %2475, %v238
        %v2477 = vpop.permute.xlu0 %2476
        %2479 = vset.pattern.permute.xlu0 31
        %2480 = vperm.xlu0 %2479, %v239
        %v2481 = vpop.permute.xlu0 %2480
        %v2483 = vlaneseq
        %v2484 = vshrl.u32 %v2483, 7
        %v2485 = vsub.s32 0, %v2484
        %v2486 = vrot.slane %v2449, %v2485
        %v2487 = vsub.f32 %v2453, %v2486
        %v2488 = vsub.f32 %v2457, %v2486
        %v2489 = vsub.f32 %v2461, %v2486
        %v2490 = vsub.f32 %v2465, %v2486
        %v2491 = vsub.f32 %v2469, %v2486
        %v2492 = vsub.f32 %v2473, %v2486
        %v2493 = vsub.f32 %v2477, %v2486
        %v2494 = vsub.f32 %v2481, %v2486
        %v2495 = vand.u32 2147483647, %v2487
        %v2496 = vand.u32 2147483647, %v2488
        %v2497 = vand.u32 2147483647, %v2489
        %v2498 = vand.u32 2147483647, %v2490
        %v2499 = vand.u32 2147483647, %v2491
        %v2500 = vand.u32 2147483647, %v2492
        %v2501 = vand.u32 2147483647, %v2493
        %v2502 = vand.u32 2147483647, %v2494
        %v2503 = vstv %s2450
        %v2504 = vmul.f32 %v2503, %v2495
        %v2505 = vmul.f32 %v2503, %v2496
        %v2506 = vmul.f32 %v2503, %v2497
        %v2507 = vmul.f32 %v2503, %v2498
        %v2508 = vmul.f32 %v2503, %v2499
        %v2509 = vmul.f32 %v2503, %v2500
        %v2510 = vmul.f32 %v2503, %v2501
        %v2511 = vmul.f32 %v2503, %v2502
        %v2512 = vadd.f32 %v2441, %v2504
        %v2513 = vadd.f32 %v2442, %v2505
        %v2514 = vadd.f32 %v2443, %v2506
        %v2515 = vadd.f32 %v2444, %v2507
        %v2516 = vadd.f32 %v2445, %v2508
        %v2517 = vadd.f32 %v2446, %v2509
        %v2518 = vadd.f32 %v2447, %v2510
        %v2519 = vadd.f32 %v2448, %v2511
        %v2520 = vstv %s214
        %v2521 = vadd.f32 %v2512, %v2520
        %v2522 = vadd.f32 %v2513, %v2520
        %v2523 = vadd.f32 %v2514, %v2520
        %v2524 = vadd.f32 %v2515, %v2520
        %v2525 = vadd.f32 %v2516, %v2520
        %v2526 = vadd.f32 %v2517, %v2520
        %v2527 = vadd.f32 %v2518, %v2520
        %v2528 = vadd.f32 %v2519, %v2520
        %v2529 = vmax.f32 %v2521, 0.0
        %v2530 = vmax.f32 %v2522, 0.0
        %v2531 = vmax.f32 %v2523, 0.0
        %v2532 = vmax.f32 %v2524, 0.0
        %v2533 = vmax.f32 %v2525, 0.0
        %v2534 = vmax.f32 %v2526, 0.0
        %v2535 = vmax.f32 %v2527, 0.0
        %v2536 = vmax.f32 %v2528, 0.0
        %v2537 = vlaneseq
        %v2538 = vand.u32 %v2537, 127
        %vm2539 = vcmp.lt.s32.totalorder %v2538, 100
        %v2540 = vsel %vm2539, %v2529, -inf
        %v2541 = vsel %vm2539, %v2530, -inf
        %v2542 = vsel %vm2539, %v2531, -inf
        %v2543 = vsel %vm2539, %v2532, -inf
        %v2544 = vsel %vm2539, %v2533, -inf
        %v2545 = vsel %vm2539, %v2534, -inf
        %v2546 = vsel %vm2539, %v2535, -inf
        %v2547 = vsel %vm2539, %v2536, -inf
        %2548 = vst [vmem:[%s206] sm:$0xff] %v2540
        %2549 = vst [vmem:[%s206 + $0x8] sm:$0xff] %v2541
        %2550 = vst [vmem:[%s206 + $0x10] sm:$0xff] %v2542
        %2551 = vst [vmem:[%s206 + $0x18] sm:$0xff] %v2543
        %2552 = vst [vmem:[%s206 + $0x20] sm:$0xff] %v2544
        %2553 = vst [vmem:[%s206 + $0x28] sm:$0xff] %v2545
        %2554 = vst [vmem:[%s206 + $0x30] sm:$0xff] %v2546
        %2555 = vst [vmem:[%s206 + $0x38] sm:$0xff] %v2547
        %v2556 = vld [vmem:[#allocation2] sm:$0xff]
        %v2557 = vld [vmem:[#allocation2 + $0x8] sm:$0xff]
        %v2558 = vld [vmem:[#allocation2 + $0x10] sm:$0xff]
        %v2559 = vld [vmem:[#allocation2 + $0x18] sm:$0xff]
        %v2560 = vld [vmem:[#allocation2 + $0x20] sm:$0xff]
        %v2561 = vld [vmem:[#allocation2 + $0x28] sm:$0xff]
        %v2562 = vld [vmem:[#allocation2 + $0x30] sm:$0xff]
        %v2563 = vld [vmem:[#allocation2 + $0x38] sm:$0xff]
        %2564 = vmax.xlane.f32.xlu0 %v2540
        %v2565 = vpop.xlane.xlu0 %2564
        %2566 = vmax.xlane.f32.xlu0 %v2541
        %v2567 = vpop.xlane.xlu0 %2566
        %2568 = vmax.xlane.f32.xlu0 %v2542
        %v2569 = vpop.xlane.xlu0 %2568
        %2570 = vmax.xlane.f32.xlu0 %v2543
        %v2571 = vpop.xlane.xlu0 %2570
        %2572 = vmax.xlane.f32.xlu0 %v2544
        %v2573 = vpop.xlane.xlu0 %2572
        %2574 = vmax.xlane.f32.xlu0 %v2545
        %v2575 = vpop.xlane.xlu0 %2574
        %2576 = vmax.xlane.f32.xlu0 %v2546
        %v2577 = vpop.xlane.xlu0 %2576
        %2578 = vmax.xlane.f32.xlu0 %v2547
        %v2579 = vpop.xlane.xlu0 %2578
        %v2580 = vmax.f32 %v2556, %v2565
        %v2581 = vmax.f32 %v2557, %v2567
        %v2582 = vmax.f32 %v2558, %v2569
        %v2583 = vmax.f32 %v2559, %v2571
        %v2584 = vmax.f32 %v2560, %v2573
        %v2585 = vmax.f32 %v2561, %v2575
        %v2586 = vmax.f32 %v2562, %v2577
        %v2587 = vmax.f32 %v2563, %v2579
        %2588 = vst.msk [vmem:[#allocation2] sm:$0xff] %vm215, %v2580
        %2589 = vst.msk [vmem:[#allocation2 + $0x8] sm:$0xff] %vm215, %v2581
        %2590 = vst.msk [vmem:[#allocation2 + $0x10] sm:$0xff] %vm215, %v2582
        %2591 = vst.msk [vmem:[#allocation2 + $0x18] sm:$0xff] %vm215, %v2583
        %2592 = vst.msk [vmem:[#allocation2 + $0x20] sm:$0xff] %vm215, %v2584
        %2593 = vst.msk [vmem:[#allocation2 + $0x28] sm:$0xff] %vm215, %v2585
        %2594 = vst.msk [vmem:[#allocation2 + $0x30] sm:$0xff] %vm215, %v2586
        %2595 = vst.msk [vmem:[#allocation2 + $0x38] sm:$0xff] %vm215, %v2587
        %v2596 = vld [vmem:[%s206] sm:$0xff]
        %v2597 = vld [vmem:[%s206 + $0x8] sm:$0xff]
        %v2598 = vld [vmem:[%s206 + $0x10] sm:$0xff]
        %v2599 = vld [vmem:[%s206 + $0x18] sm:$0xff]
        %v2600 = vld [vmem:[%s206 + $0x20] sm:$0xff]
        %v2601 = vld [vmem:[%s206 + $0x28] sm:$0xff]
        %v2602 = vld [vmem:[%s206 + $0x30] sm:$0xff]
        %v2603 = vld [vmem:[%s206 + $0x38] sm:$0xff]
        %v2604 = vld [vmem:[#allocation2] sm:$0xff]
        %v2605 = vld [vmem:[#allocation2 + $0x8] sm:$0xff]
        %v2606 = vld [vmem:[#allocation2 + $0x10] sm:$0xff]
        %v2607 = vld [vmem:[#allocation2 + $0x18] sm:$0xff]
        %v2608 = vld [vmem:[#allocation2 + $0x20] sm:$0xff]
        %v2609 = vld [vmem:[#allocation2 + $0x28] sm:$0xff]
        %v2610 = vld [vmem:[#allocation2 + $0x30] sm:$0xff]
        %v2611 = vld [vmem:[#allocation2 + $0x38] sm:$0xff]
        %2613 = vset.pattern.permute.xlu0 0
        %2614 = vperm.xlu0 %2613, %v2604
        %v2615 = vpop.permute.xlu0 %2614
        %2618 = vset.pattern.permute.xlu0 0
        %2619 = vperm.xlu0 %2618, %v2605
        %v2620 = vpop.permute.xlu0 %2619
        %2623 = vset.pattern.permute.xlu0 0
        %2624 = vperm.xlu0 %2623, %v2606
        %v2625 = vpop.permute.xlu0 %2624
        %2628 = vset.pattern.permute.xlu0 0
        %2629 = vperm.xlu0 %2628, %v2607
        %v2630 = vpop.permute.xlu0 %2629
        %2633 = vset.pattern.permute.xlu0 0
        %2634 = vperm.xlu0 %2633, %v2608
        %v2635 = vpop.permute.xlu0 %2634
        %2638 = vset.pattern.permute.xlu0 0
        %2639 = vperm.xlu0 %2638, %v2609
        %v2640 = vpop.permute.xlu0 %2639
        %2643 = vset.pattern.permute.xlu0 0
        %2644 = vperm.xlu0 %2643, %v2610
        %v2645 = vpop.permute.xlu0 %2644
        %2648 = vset.pattern.permute.xlu0 0
        %2649 = vperm.xlu0 %2648, %v2611
        %v2650 = vpop.permute.xlu0 %2649
        %v2652 = vsub.f32 %v2596, %v2615
        %v2653 = vsub.f32 %v2597, %v2620
        %v2654 = vsub.f32 %v2598, %v2625
        %v2655 = vsub.f32 %v2599, %v2630
        %v2656 = vsub.f32 %v2600, %v2635
        %v2657 = vsub.f32 %v2601, %v2640
        %v2658 = vsub.f32 %v2602, %v2645
        %v2659 = vsub.f32 %v2603, %v2650
        %v2660 = vmul.f32 %v2652, 1.442695
        %v2661 = vpow.pop %v2660
        %v2662 = vmul.f32 %v2653, 1.442695
        %v2663 = vpow.pop %v2662
        %v2664 = vmul.f32 %v2654, 1.442695
        %v2665 = vpow.pop %v2664
        %v2666 = vmul.f32 %v2655, 1.442695
        %v2667 = vpow.pop %v2666
        %v2668 = vmul.f32 %v2656, 1.442695
        %v2669 = vpow.pop %v2668
        %v2670 = vmul.f32 %v2657, 1.442695
        %v2671 = vpow.pop %v2670
        %v2672 = vmul.f32 %v2658, 1.442695
        %v2673 = vpow.pop %v2672
        %v2674 = vmul.f32 %v2659, 1.442695
        %v2675 = vpow.pop %v2674
        %2676 = vst [vmem:[%s206] sm:$0xff] %v2661
        %2677 = vst [vmem:[%s206 + $0x8] sm:$0xff] %v2663
        %2678 = vst [vmem:[%s206 + $0x10] sm:$0xff] %v2665
        %2679 = vst [vmem:[%s206 + $0x18] sm:$0xff] %v2667
        %2680 = vst [vmem:[%s206 + $0x20] sm:$0xff] %v2669
        %2681 = vst [vmem:[%s206 + $0x28] sm:$0xff] %v2671
        %2682 = vst [vmem:[%s206 + $0x30] sm:$0xff] %v2673
        %2683 = vst [vmem:[%s206 + $0x38] sm:$0xff] %v2675
        %v2684 = vld [vmem:[#allocation3] sm:$0xff]
        %v2685 = vld [vmem:[#allocation3 + $0x8] sm:$0xff]
        %v2686 = vld [vmem:[#allocation3 + $0x10] sm:$0xff]
        %v2687 = vld [vmem:[#allocation3 + $0x18] sm:$0xff]
        %v2688 = vld [vmem:[#allocation3 + $0x20] sm:$0xff]
        %v2689 = vld [vmem:[#allocation3 + $0x28] sm:$0xff]
        %v2690 = vld [vmem:[#allocation3 + $0x30] sm:$0xff]
        %v2691 = vld [vmem:[#allocation3 + $0x38] sm:$0xff]
        %2692 = vadd.xlane.f32.xlu0 %v2661
        %v2693 = vpop.xlane.xlu0 %2692
        %2694 = vadd.xlane.f32.xlu0 %v2663
        %v2695 = vpop.xlane.xlu0 %2694
        %2696 = vadd.xlane.f32.xlu0 %v2665
        %v2697 = vpop.xlane.xlu0 %2696
        %2698 = vadd.xlane.f32.xlu0 %v2667
        %v2699 = vpop.xlane.xlu0 %2698
        %2700 = vadd.xlane.f32.xlu0 %v2669
        %v2701 = vpop.xlane.xlu0 %2700
        %2702 = vadd.xlane.f32.xlu0 %v2671
        %v2703 = vpop.xlane.xlu0 %2702
        %2704 = vadd.xlane.f32.xlu0 %v2673
        %v2705 = vpop.xlane.xlu0 %2704
        %2706 = vadd.xlane.f32.xlu0 %v2675
        %v2707 = vpop.xlane.xlu0 %2706
        %v2708 = vadd.f32 %v2684, %v2693
        %v2709 = vadd.f32 %v2685, %v2695
        %v2710 = vadd.f32 %v2686, %v2697
        %v2711 = vadd.f32 %v2687, %v2699
        %v2712 = vadd.f32 %v2688, %v2701
        %v2713 = vadd.f32 %v2689, %v2703
        %v2714 = vadd.f32 %v2690, %v2705
        %v2715 = vadd.f32 %v2691, %v2707
        %2716 = vst.msk [vmem:[#allocation3] sm:$0xff] %vm215, %v2708
        %2717 = vst.msk [vmem:[#allocation3 + $0x8] sm:$0xff] %vm215, %v2709
        %2718 = vst.msk [vmem:[#allocation3 + $0x10] sm:$0xff] %vm215, %v2710
        %2719 = vst.msk [vmem:[#allocation3 + $0x18] sm:$0xff] %vm215, %v2711
        %2720 = vst.msk [vmem:[#allocation3 + $0x20] sm:$0xff] %vm215, %v2712
        %2721 = vst.msk [vmem:[#allocation3 + $0x28] sm:$0xff] %vm215, %v2713
        %2722 = vst.msk [vmem:[#allocation3 + $0x30] sm:$0xff] %vm215, %v2714
        %2723 = vst.msk [vmem:[#allocation3 + $0x38] sm:$0xff] %vm215, %v2715
        %v2724 = vld [vmem:[#allocation3] sm:$0xff]
        %v2725 = vld [vmem:[#allocation3 + $0x8] sm:$0xff]
        %v2726 = vld [vmem:[#allocation3 + $0x10] sm:$0xff]
        %v2727 = vld [vmem:[#allocation3 + $0x18] sm:$0xff]
        %v2728 = vld [vmem:[#allocation3 + $0x20] sm:$0xff]
        %v2729 = vld [vmem:[#allocation3 + $0x28] sm:$0xff]
        %v2730 = vld [vmem:[#allocation3 + $0x30] sm:$0xff]
        %v2731 = vld [vmem:[#allocation3 + $0x38] sm:$0xff]
        %v2732 = vrcp.pop %v2724
        %v2733 = vmul.f32 1.0, %v2732
        %v2734 = vrcp.pop %v2725
        %v2735 = vmul.f32 1.0, %v2734
        %v2736 = vrcp.pop %v2726
        %v2737 = vmul.f32 1.0, %v2736
        %v2738 = vrcp.pop %v2727
        %v2739 = vmul.f32 1.0, %v2738
        %v2740 = vrcp.pop %v2728
        %v2741 = vmul.f32 1.0, %v2740
        %v2742 = vrcp.pop %v2729
        %v2743 = vmul.f32 1.0, %v2742
        %v2744 = vrcp.pop %v2730
        %v2745 = vmul.f32 1.0, %v2744
        %v2746 = vrcp.pop %v2731
        %v2747 = vmul.f32 1.0, %v2746
        %v2748 = vld [vmem:[%s206] sm:$0xff]
        %v2749 = vld [vmem:[%s206 + $0x8] sm:$0xff]
        %v2750 = vld [vmem:[%s206 + $0x10] sm:$0xff]
        %v2751 = vld [vmem:[%s206 + $0x18] sm:$0xff]
        %v2752 = vld [vmem:[%s206 + $0x20] sm:$0xff]
        %v2753 = vld [vmem:[%s206 + $0x28] sm:$0xff]
        %v2754 = vld [vmem:[%s206 + $0x30] sm:$0xff]
        %v2755 = vld [vmem:[%s206 + $0x38] sm:$0xff]
        %2757 = vset.pattern.permute.xlu0 0
        %2758 = vperm.xlu0 %2757, %v2733
        %v2759 = vpop.permute.xlu0 %2758
        %2762 = vset.pattern.permute.xlu0 0
        %2763 = vperm.xlu0 %2762, %v2735
        %v2764 = vpop.permute.xlu0 %2763
        %2767 = vset.pattern.permute.xlu0 0
        %2768 = vperm.xlu0 %2767, %v2737
        %v2769 = vpop.permute.xlu0 %2768
        %2772 = vset.pattern.permute.xlu0 0
        %2773 = vperm.xlu0 %2772, %v2739
        %v2774 = vpop.permute.xlu0 %2773
        %2777 = vset.pattern.permute.xlu0 0
        %2778 = vperm.xlu0 %2777, %v2741
        %v2779 = vpop.permute.xlu0 %2778
        %2782 = vset.pattern.permute.xlu0 0
        %2783 = vperm.xlu0 %2782, %v2743
        %v2784 = vpop.permute.xlu0 %2783
        %2787 = vset.pattern.permute.xlu0 0
        %2788 = vperm.xlu0 %2787, %v2745
        %v2789 = vpop.permute.xlu0 %2788
        %2792 = vset.pattern.permute.xlu0 0
        %2793 = vperm.xlu0 %2792, %v2747
        %v2794 = vpop.permute.xlu0 %2793
        %v2796 = vmul.f32 %v2748, %v2759
        %v2797 = vmul.f32 %v2749, %v2764
        %v2798 = vmul.f32 %v2750, %v2769
        %v2799 = vmul.f32 %v2751, %v2774
        %v2800 = vmul.f32 %v2752, %v2779
        %v2801 = vmul.f32 %v2753, %v2784
        %v2802 = vmul.f32 %v2754, %v2789
        %v2803 = vmul.f32 %v2755, %v2794
        %2804 = vst [vmem:[%s206] sm:$0xff] %v2796
        %2805 = vst [vmem:[%s206 + $0x8] sm:$0xff] %v2797
        %2806 = vst [vmem:[%s206 + $0x10] sm:$0xff] %v2798
        %2807 = vst [vmem:[%s206 + $0x18] sm:$0xff] %v2799
        %2808 = vst [vmem:[%s206 + $0x20] sm:$0xff] %v2800
        %2809 = vst [vmem:[%s206 + $0x28] sm:$0xff] %v2801
        %2810 = vst [vmem:[%s206 + $0x30] sm:$0xff] %v2802
        %2811 = vst [vmem:[%s206 + $0x38] sm:$0xff] %v2803
        %s2812 = sand.u32 %s117, 1
        %s2813 = scalar_lea.sflag [#allocation6], %s2812
        %s2814 = sand.u32 %s117, 1
        %s2815 = smul.addr %s2814, 64
        %s2816 = scalar_lea.vmem [#allocation8], %s2815
        // Predicated region
        $region41: #{tpu_custom_call.1} parent=35 // pred_check
          %p2817 = pneg %p127
        $region42: #{tpu_custom_call.1} parent=35 // pred_check_branch
          %2819 = sbr.rel (%p2817) target = $region44
        $region43: #{tpu_custom_call.1} parent=35 // pred_region
          %s2820 = smul.u32 8, %s20
          %s2822 = ssub.s32 1024, 1024
          %2823 = vsyncadd %s2813, %s2822
          %s2824 = smul.addr %s2820, 128
          %s2825 = scalar_lea.hbm %s4, %s2824
          %s2826 = sshll.u32 %s2816, 4
          %s2827 = int_to_ptr.vmem [resolvable:$true] %s2826
          %2832 = dma.vmem_to_hbm [thread:$0]  %s2827, 1024, %s2825, %s2813, 128, 128, 8
        $region44: #{tpu_custom_call.1} parent=35 // pred_fallthru
          _
      $region36: #{tpu_custom_call.1} parent=5 // pred_fallthru
        _
      %p2833 = scmp.le.s32.totalorder 2, %s15
      // Predicated region
      $region45: #{tpu_custom_call.1} parent=5 // pred_check
        %p2834 = pneg %p2833
      $region46: #{tpu_custom_call.1} parent=5 // pred_check_branch
        %2836 = sbr.rel (%p2834) target = $region48
      $region47: #{tpu_custom_call.1} parent=5 // pred_region
        %s2837 = ssub.s32 %s15, 2
        // Predicated region
        $region49: #{tpu_custom_call.1} parent=47 // pred_check
          %p2838 = pneg %p133
        $region50: #{tpu_custom_call.1} parent=47 // pred_check_branch
          %2840 = sbr.rel (%p2838) target = $region52
        $region51: #{tpu_custom_call.1} parent=47 // pred_region
          %s2841 = sand.u32 %s118, 1
          %s2842 = scalar_lea.sflag [#allocation6], %s2841
          %s2843 = sand.u32 %s118, 1
          %s2844 = smul.addr %s2843, 64
          %s2845 = scalar_lea.vmem [#allocation8], %s2844
          %2846 = dma.done %s2842, 1024
        $region52: #{tpu_custom_call.1} parent=47 // pred_fallthru
          _
      $region48: #{tpu_custom_call.1} parent=5 // pred_fallthru
        _
    $region6: #{tpu_custom_call.1} parent=1 // loop_footer
      %s19 = sadd.s32 1, %s15
    $region7: #{tpu_custom_call.1} parent=1 // loop_footer_branch
      %14 = sbr.rel target = $region3
    $region8: #{tpu_custom_call.1} parent=1 // loop_exit
      _
    %2847 = vsyncpa [#allocation6], 1
    %s2848 = scalar_lea.sflag [#allocation6], 1
    %2849 = vsyncpa %s2848, 1
    %2850 = vsyncpa [#allocation7], 1
    %s2851 = scalar_lea.sflag [#allocation7], 1
    %2852 = vsyncpa %s2851, 1

</llo_original>
